<compile_context>
chip_gen: v5e
topology: v5e:2x2
jax: 0.10.0
libtpu: 0.0.40
codegen_flags: <defaults>
</compile_context>

<pallas_src>
import functools

import jax
import jax.numpy as jnp
from jax import lax
from jax.experimental import pallas as pl
from jax.experimental.pallas import tpu as pltpu


def _attention_kernel(x_ref, wqkv_ref, wp_ref, bp_ref,
                      o_ref, k_ref, v_ref, y_scratch,
                      *, num_heads, head_dim):
    # x_ref:     (1, N, C)
    # wqkv_ref:  (C, 3C)   qkv weight, (in, out) layout, q-columns pre-scaled
    # wp_ref:    (C, C)    proj weight, (in, out) layout
    # bp_ref:    (1, C)    proj bias
    # o_ref:     (1, N, C) attention output (after proj)
    # k_ref:     (1, N, C) lane-dense k (head h lives in columns h*D:(h+1)*D)
    # v_ref:     (1, N, C) lane-dense v
    # y_scratch: (N, C) f32 per-head results, merged for the single proj matmul
    x = x_ref[0]
    c = x.shape[1]

    # One MXU pass for q, k and v of every head: (N, C) @ (C, 3C).
    qkv = jnp.dot(x, wqkv_ref[...], preferred_element_type=jnp.float32)

    k_all = qkv[:, c:2 * c]          # (N, C)
    v_all = qkv[:, 2 * c:]           # (N, C)
    k_ref[0] = k_all.astype(k_ref.dtype)
    v_ref[0] = v_all.astype(v_ref.dtype)

    # Static per-head loop (H is small); everything is lane sub-selects of
    # the (N, 3C) slab.  Softmax math stays in f32 on the VPU.
    for h in range(num_heads):
        lo = h * head_dim
        hi = lo + head_dim
        q_h = qkv[:, lo:hi]          # (N, D), already scaled via the weight
        k_h = k_all[:, lo:hi]        # (N, D)
        v_h = v_all[:, lo:hi]        # (N, D)

        # scores = (q * scale) @ k^T  (scale folded into the weight).
        s = lax.dot_general(q_h, k_h, (((1,), (1,)), ((), ())),
                            preferred_element_type=jnp.float32)   # (N, N)
        s = s - jnp.max(s, axis=-1, keepdims=True)
        p = jnp.exp(s)
        p = p * pl.reciprocal(jnp.sum(p, axis=-1, keepdims=True), approx=True)
        # TODO(synk): attn_drop / proj_drop are p=0.0 (eval) -> identity.

        # Head output into its column slab; projection happens once after
        # the loop instead of H tiny per-head matmul+accumulates.
        y_scratch[:, lo:hi] = jnp.dot(p, v_h,
                                      preferred_element_type=jnp.float32)

    out = jnp.dot(y_scratch[...], wp_ref[...],
                  preferred_element_type=jnp.float32) + bp_ref[...]
    o_ref[0] = out.astype(o_ref.dtype)


def attention(x, wqkv, wp, bp, *, num_heads):
    """Pallas implementation of Attention.forward (eval mode).

    Args:
      x:    (B, N, C)
      wqkv: (3C, C)  qkv Linear weight, PyTorch layout (out, in), no bias.
      wp:   (C, C)   proj Linear weight, PyTorch layout (out, in).
      bp:   (C,)     proj bias.
    Returns:
      (out, k, v): out (B, N, C), k/v (B, H, N, D) — same as the module.
    """
    B, N, C = x.shape
    assert C % num_heads == 0
    D = C // num_heads
    scale = float(D) ** -0.5

    # Glue (plain JAX, outside the kernel): transpose weights to (in, out)
    # and fold the softmax scale into the q columns so the kernel never
    # scales the per-head score matrices.
    wqkv_t = wqkv.T                                                  # (C, 3C)
    wqkv_t = jnp.concatenate([wqkv_t[:, :C] * scale, wqkv_t[:, C:]], axis=1)
    wp_t = wp.T                                                      # (C, C)
    bp2 = bp.reshape(1, C)

    kernel = functools.partial(_attention_kernel,
                               num_heads=num_heads, head_dim=D)

    out, k_flat, v_flat = pl.pallas_call(
        kernel,
        out_shape=(
            jax.ShapeDtypeStruct((B, N, C), x.dtype),   # proj output
            jax.ShapeDtypeStruct((B, N, C), x.dtype),   # k (lane-dense)
            jax.ShapeDtypeStruct((B, N, C), x.dtype),   # v (lane-dense)
        ),
        grid_spec=pltpu.PrefetchScalarGridSpec(
            num_scalar_prefetch=0,
            grid=(B,),
            in_specs=[
                pl.BlockSpec((1, N, C), lambda b: (b, 0, 0)),
                pl.BlockSpec((C, 3 * C), lambda b: (0, 0)),
                pl.BlockSpec((C, C), lambda b: (0, 0)),
                pl.BlockSpec((1, C), lambda b: (0, 0)),
            ],
            out_specs=[
                pl.BlockSpec((1, N, C), lambda b: (b, 0, 0)),
                pl.BlockSpec((1, N, C), lambda b: (b, 0, 0)),
                pl.BlockSpec((1, N, C), lambda b: (b, 0, 0)),
            ],
            scratch_shapes=[pltpu.VMEM((N, C), jnp.float32)],
        ),
        compiler_params=pltpu.CompilerParams(
            dimension_semantics=("parallel",)),
    )(x, wqkv_t, wp_t, bp2)

    # Layout plumbing only: present k/v in the module's (B, H, N, D) layout.
    k = k_flat.reshape(B, N, num_heads, D).transpose(0, 2, 1, 3)
    v = v_flat.reshape(B, N, num_heads, D).transpose(0, 2, 1, 3)
    return out, k, v


def _reference(x, wqkv, wp, bp, num_heads):
    """Pure-JAX transcription of the PyTorch forward (eval mode)."""
    B, N, C = x.shape
    D = C // num_heads
    qkv = (x @ wqkv.T).reshape(B, N, 3, num_heads, D)
    qkv = jnp.transpose(qkv, (2, 0, 3, 1, 4))          # (3, B, H, N, D)
    q, k, v = qkv[0], qkv[1], qkv[2]
    attn = jnp.einsum('bhnd,bhmd->bhnm', q, k) * (float(D) ** -0.5)
    attn = jax.nn.softmax(attn, axis=-1)
    y = jnp.einsum('bhnm,bhmd->bhnd', attn, v)
    y = jnp.transpose(y, (0, 2, 1, 3)).reshape(B, N, C)
    out = y @ wp.T + bp
    return out, k, v


if __name__ == "__main__":
    # Small shapes consistent with the module: dim=128 (lane-dense), 8 heads,
    # head_dim=16, sequence length N=16, batch B=2.
    B, N, C, H = 2, 16, 128, 8
    D = C // H

    key = jax.random.PRNGKey(0)
    kx, kwq, kwp, kbp = jax.random.split(key, 4)

    x = jax.random.normal(kx, (B, N, C), dtype=jnp.float32)
    # Deterministic "module" parameters (PyTorch Linear layout: (out, in)).
    wqkv = jax.random.normal(kwq, (3 * C, C), dtype=jnp.float32) * 0.05
    wp = jax.random.normal(kwp, (C, C), dtype=jnp.float32) * 0.05
    bp = jax.random.normal(kbp, (C,), dtype=jnp.float32) * 0.05

    out, k, v = attention(x, wqkv, wp, bp, num_heads=H)
    out = jax.block_until_ready(out)

    ref_out, ref_k, ref_v = _reference(x, wqkv, wp, bp, H)
    assert out.shape == (B, N, C), out.shape
    assert k.shape == (B, H, N, D) and v.shape == (B, H, N, D), (k.shape, v.shape)
    assert jnp.allclose(k, ref_k, atol=2e-3, rtol=2e-3), (
        float(jnp.max(jnp.abs(k - ref_k))))
    assert jnp.allclose(v, ref_v, atol=2e-3, rtol=2e-3), (
        float(jnp.max(jnp.abs(v - ref_v))))
    assert jnp.allclose(out, ref_out, atol=5e-3, rtol=5e-3), (
        float(jnp.max(jnp.abs(out - ref_out))))

    print("KERNEL_OK")
</pallas_src>

<mosaic_0001>
module attributes {stable_mosaic.version = 11 : i64} {
  func.func @_attention_kernel(%arg0: i32, %arg1: memref<1x16x128xf32, #tpu.memory_space<vmem>>, %arg2: memref<128x384xf32, #tpu.memory_space<vmem>>, %arg3: memref<128x128xf32, #tpu.memory_space<vmem>>, %arg4: memref<1x128xf32, #tpu.memory_space<vmem>>, %arg5: memref<1x16x128xf32, #tpu.memory_space<vmem>>, %arg6: memref<1x16x128xf32, #tpu.memory_space<vmem>>, %arg7: memref<1x16x128xf32, #tpu.memory_space<vmem>>, %arg8: memref<16x128xf32, #tpu.memory_space<vmem>>) attributes {dimension_semantics = [#tpu.dimension_semantics<parallel>], iteration_bounds = array<i64: 2>, scalar_prefetch = 0 : i64, scratch_operands = 1 : i64, tpu.core_type = #tpu.core_type<tc>, window_params = [{transform_indices = @transform_0, window_bounds = array<i64: 1, 16, 128>}, {pipeline_mode = #tpu.pipeline_mode<synchronous>, transform_indices = @transform_1, window_bounds = array<i64: 128, 384>}, {pipeline_mode = #tpu.pipeline_mode<synchronous>, transform_indices = @transform_2, window_bounds = array<i64: 128, 128>}, {pipeline_mode = #tpu.pipeline_mode<synchronous>, transform_indices = @transform_3, window_bounds = array<i64: 1, 128>}, {transform_indices = @transform_4, window_bounds = array<i64: 1, 16, 128>}, {transform_indices = @transform_5, window_bounds = array<i64: 1, 16, 128>}, {transform_indices = @transform_6, window_bounds = array<i64: 1, 16, 128>}]} {
    %c0 = arith.constant 0 : index
    %c0_0 = arith.constant 0 : index
    %c0_1 = arith.constant 0 : index
    %0 = vector.load %arg1[%c0, %c0_0, %c0_1] : memref<1x16x128xf32, #tpu.memory_space<vmem>>, vector<1x16x128xf32>
    %1 = vector.shape_cast %0 : vector<1x16x128xf32> to vector<16x128xf32>
    %c0_2 = arith.constant 0 : index
    %c0_3 = arith.constant 0 : index
    %2 = vector.load %arg2[%c0_2, %c0_3] : memref<128x384xf32, #tpu.memory_space<vmem>>, vector<128x384xf32>
    %cst = arith.constant dense<0.000000e+00> : vector<16x384xf32>
    %3 = tpu.matmul %1, %2, %cst {dimension_numbers = #tpu.dot_dimension_numbers<[1], [0], [0], [1], [0, 0, 1, 1], [], []>} : vector<16x128xf32>, vector<128x384xf32>, vector<16x384xf32> -> vector<16x384xf32>
    %4 = vector.extract_strided_slice %3 {offsets = [0, 128], sizes = [16, 128], strides = [1, 1]} : vector<16x384xf32> to vector<16x128xf32>
    %5 = vector.extract_strided_slice %3 {offsets = [0, 256], sizes = [16, 128], strides = [1, 1]} : vector<16x384xf32> to vector<16x128xf32>
    %c0_4 = arith.constant 0 : index
    %c0_5 = arith.constant 0 : index
    %c0_6 = arith.constant 0 : index
    %6 = vector.load %arg6[%c0_4, %c0_5, %c0_6] : memref<1x16x128xf32, #tpu.memory_space<vmem>>, vector<1x16x128xf32>
    %7 = vector.shape_cast %6 : vector<1x16x128xf32> to vector<16x128xf32>
    %8 = vector.shape_cast %4 : vector<16x128xf32> to vector<1x16x128xf32>
    tpu.vector_store %arg6[%c0_4, %c0_5, %c0_6], %8 {strides = array<i32>} : memref<1x16x128xf32, #tpu.memory_space<vmem>>, vector<1x16x128xf32>,
    %c0_7 = arith.constant 0 : index
    %c0_8 = arith.constant 0 : index
    %c0_9 = arith.constant 0 : index
    %9 = vector.load %arg7[%c0_7, %c0_8, %c0_9] : memref<1x16x128xf32, #tpu.memory_space<vmem>>, vector<1x16x128xf32>
    %10 = vector.shape_cast %9 : vector<1x16x128xf32> to vector<16x128xf32>
    %11 = vector.shape_cast %5 : vector<16x128xf32> to vector<1x16x128xf32>
    tpu.vector_store %arg7[%c0_7, %c0_8, %c0_9], %11 {strides = array<i32>} : memref<1x16x128xf32, #tpu.memory_space<vmem>>, vector<1x16x128xf32>,
    %12 = vector.extract_strided_slice %3 {offsets = [0, 0], sizes = [16, 16], strides = [1, 1]} : vector<16x384xf32> to vector<16x16xf32>
    %13 = vector.extract_strided_slice %4 {offsets = [0, 0], sizes = [16, 16], strides = [1, 1]} : vector<16x128xf32> to vector<16x16xf32>
    %14 = vector.extract_strided_slice %5 {offsets = [0, 0], sizes = [16, 16], strides = [1, 1]} : vector<16x128xf32> to vector<16x16xf32>
    %cst_10 = arith.constant dense<0.000000e+00> : vector<16x16xf32>
    %15 = tpu.matmul %12, %13, %cst_10 {dimension_numbers = #tpu.dot_dimension_numbers<[1], [1], [0], [0], [0, 0, 1, 0], [], []>} : vector<16x16xf32>, vector<16x16xf32>, vector<16x16xf32> -> vector<16x16xf32>
    %cst_11 = arith.constant dense<0xFF800000> : vector<16xf32>
    %16 = vector.multi_reduction <maximumf>, %15, %cst_11 [1] : vector<16x16xf32> to vector<16xf32>
    %17 = vector.shape_cast %16 : vector<16xf32> to vector<16x1xf32>
    %18 = vector.broadcast %17 : vector<16x1xf32> to vector<16x16xf32>
    %19 = arith.subf %15, %18 : vector<16x16xf32>
    %20 = math.exp %19 : vector<16x16xf32>
    %cst_12 = arith.constant dense<0.000000e+00> : vector<16xf32>
    %21 = vector.multi_reduction <add>, %20, %cst_12 [1] : vector<16x16xf32> to vector<16xf32>
    %22 = vector.shape_cast %21 : vector<16xf32> to vector<16x1xf32>
    %23 = tpu.reciprocal %22 {approx = true} : vector<16x1xf32> -> vector<16x1xf32>
    %24 = vector.broadcast %23 : vector<16x1xf32> to vector<16x16xf32>
    %25 = arith.mulf %20, %24 : vector<16x16xf32>
    %cst_13 = arith.constant dense<0.000000e+00> : vector<16x16xf32>
    %26 = tpu.matmul %25, %14, %cst_13 {dimension_numbers = #tpu.dot_dimension_numbers<[1], [0], [0], [1], [0, 0, 1, 1], [], []>} : vector<16x16xf32>, vector<16x16xf32>, vector<16x16xf32> -> vector<16x16xf32>
    %c0_14 = arith.constant 0 : index
    %c0_15 = arith.constant 0 : index
    %27 = vector.load %arg8[%c0_14, %c0_15] : memref<16x128xf32, #tpu.memory_space<vmem>>, vector<16x16xf32>
    tpu.vector_store %arg8[%c0_14, %c0_15], %26 {strides = array<i32>} : memref<16x128xf32, #tpu.memory_space<vmem>>, vector<16x16xf32>,
    %28 = vector.extract_strided_slice %3 {offsets = [0, 16], sizes = [16, 16], strides = [1, 1]} : vector<16x384xf32> to vector<16x16xf32>
    %29 = vector.extract_strided_slice %4 {offsets = [0, 16], sizes = [16, 16], strides = [1, 1]} : vector<16x128xf32> to vector<16x16xf32>
    %30 = vector.extract_strided_slice %5 {offsets = [0, 16], sizes = [16, 16], strides = [1, 1]} : vector<16x128xf32> to vector<16x16xf32>
    %cst_16 = arith.constant dense<0.000000e+00> : vector<16x16xf32>
    %31 = tpu.matmul %28, %29, %cst_16 {dimension_numbers = #tpu.dot_dimension_numbers<[1], [1], [0], [0], [0, 0, 1, 0], [], []>} : vector<16x16xf32>, vector<16x16xf32>, vector<16x16xf32> -> vector<16x16xf32>
    %cst_17 = arith.constant dense<0xFF800000> : vector<16xf32>
    %32 = vector.multi_reduction <maximumf>, %31, %cst_17 [1] : vector<16x16xf32> to vector<16xf32>
    %33 = vector.shape_cast %32 : vector<16xf32> to vector<16x1xf32>
    %34 = vector.broadcast %33 : vector<16x1xf32> to vector<16x16xf32>
    %35 = arith.subf %31, %34 : vector<16x16xf32>
    %36 = math.exp %35 : vector<16x16xf32>
    %cst_18 = arith.constant dense<0.000000e+00> : vector<16xf32>
    %37 = vector.multi_reduction <add>, %36, %cst_18 [1] : vector<16x16xf32> to vector<16xf32>
    %38 = vector.shape_cast %37 : vector<16xf32> to vector<16x1xf32>
    %39 = tpu.reciprocal %38 {approx = true} : vector<16x1xf32> -> vector<16x1xf32>
    %40 = vector.broadcast %39 : vector<16x1xf32> to vector<16x16xf32>
    %41 = arith.mulf %36, %40 : vector<16x16xf32>
    %cst_19 = arith.constant dense<0.000000e+00> : vector<16x16xf32>
    %42 = tpu.matmul %41, %30, %cst_19 {dimension_numbers = #tpu.dot_dimension_numbers<[1], [0], [0], [1], [0, 0, 1, 1], [], []>} : vector<16x16xf32>, vector<16x16xf32>, vector<16x16xf32> -> vector<16x16xf32>
    %c0_20 = arith.constant 0 : index
    %c16 = arith.constant 16 : index
    %43 = vector.load %arg8[%c0_20, %c16] : memref<16x128xf32, #tpu.memory_space<vmem>>, vector<16x16xf32>
    tpu.vector_store %arg8[%c0_20, %c16], %42 {strides = array<i32>} : memref<16x128xf32, #tpu.memory_space<vmem>>, vector<16x16xf32>,
    %44 = vector.extract_strided_slice %3 {offsets = [0, 32], sizes = [16, 16], strides = [1, 1]} : vector<16x384xf32> to vector<16x16xf32>
    %45 = vector.extract_strided_slice %4 {offsets = [0, 32], sizes = [16, 16], strides = [1, 1]} : vector<16x128xf32> to vector<16x16xf32>
    %46 = vector.extract_strided_slice %5 {offsets = [0, 32], sizes = [16, 16], strides = [1, 1]} : vector<16x128xf32> to vector<16x16xf32>
    %cst_21 = arith.constant dense<0.000000e+00> : vector<16x16xf32>
    %47 = tpu.matmul %44, %45, %cst_21 {dimension_numbers = #tpu.dot_dimension_numbers<[1], [1], [0], [0], [0, 0, 1, 0], [], []>} : vector<16x16xf32>, vector<16x16xf32>, vector<16x16xf32> -> vector<16x16xf32>
    %cst_22 = arith.constant dense<0xFF800000> : vector<16xf32>
    %48 = vector.multi_reduction <maximumf>, %47, %cst_22 [1] : vector<16x16xf32> to vector<16xf32>
    %49 = vector.shape_cast %48 : vector<16xf32> to vector<16x1xf32>
    %50 = vector.broadcast %49 : vector<16x1xf32> to vector<16x16xf32>
    %51 = arith.subf %47, %50 : vector<16x16xf32>
    %52 = math.exp %51 : vector<16x16xf32>
    %cst_23 = arith.constant dense<0.000000e+00> : vector<16xf32>
    %53 = vector.multi_reduction <add>, %52, %cst_23 [1] : vector<16x16xf32> to vector<16xf32>
    %54 = vector.shape_cast %53 : vector<16xf32> to vector<16x1xf32>
    %55 = tpu.reciprocal %54 {approx = true} : vector<16x1xf32> -> vector<16x1xf32>
    %56 = vector.broadcast %55 : vector<16x1xf32> to vector<16x16xf32>
    %57 = arith.mulf %52, %56 : vector<16x16xf32>
    %cst_24 = arith.constant dense<0.000000e+00> : vector<16x16xf32>
    %58 = tpu.matmul %57, %46, %cst_24 {dimension_numbers = #tpu.dot_dimension_numbers<[1], [0], [0], [1], [0, 0, 1, 1], [], []>} : vector<16x16xf32>, vector<16x16xf32>, vector<16x16xf32> -> vector<16x16xf32>
    %c0_25 = arith.constant 0 : index
    %c32 = arith.constant 32 : index
    %59 = vector.load %arg8[%c0_25, %c32] : memref<16x128xf32, #tpu.memory_space<vmem>>, vector<16x16xf32>
    tpu.vector_store %arg8[%c0_25, %c32], %58 {strides = array<i32>} : memref<16x128xf32, #tpu.memory_space<vmem>>, vector<16x16xf32>,
    %60 = vector.extract_strided_slice %3 {offsets = [0, 48], sizes = [16, 16], strides = [1, 1]} : vector<16x384xf32> to vector<16x16xf32>
    %61 = vector.extract_strided_slice %4 {offsets = [0, 48], sizes = [16, 16], strides = [1, 1]} : vector<16x128xf32> to vector<16x16xf32>
    %62 = vector.extract_strided_slice %5 {offsets = [0, 48], sizes = [16, 16], strides = [1, 1]} : vector<16x128xf32> to vector<16x16xf32>
    %cst_26 = arith.constant dense<0.000000e+00> : vector<16x16xf32>
    %63 = tpu.matmul %60, %61, %cst_26 {dimension_numbers = #tpu.dot_dimension_numbers<[1], [1], [0], [0], [0, 0, 1, 0], [], []>} : vector<16x16xf32>, vector<16x16xf32>, vector<16x16xf32> -> vector<16x16xf32>
    %cst_27 = arith.constant dense<0xFF800000> : vector<16xf32>
    %64 = vector.multi_reduction <maximumf>, %63, %cst_27 [1] : vector<16x16xf32> to vector<16xf32>
    %65 = vector.shape_cast %64 : vector<16xf32> to vector<16x1xf32>
    %66 = vector.broadcast %65 : vector<16x1xf32> to vector<16x16xf32>
    %67 = arith.subf %63, %66 : vector<16x16xf32>
    %68 = math.exp %67 : vector<16x16xf32>
    %cst_28 = arith.constant dense<0.000000e+00> : vector<16xf32>
    %69 = vector.multi_reduction <add>, %68, %cst_28 [1] : vector<16x16xf32> to vector<16xf32>
    %70 = vector.shape_cast %69 : vector<16xf32> to vector<16x1xf32>
    %71 = tpu.reciprocal %70 {approx = true} : vector<16x1xf32> -> vector<16x1xf32>
    %72 = vector.broadcast %71 : vector<16x1xf32> to vector<16x16xf32>
    %73 = arith.mulf %68, %72 : vector<16x16xf32>
    %cst_29 = arith.constant dense<0.000000e+00> : vector<16x16xf32>
    %74 = tpu.matmul %73, %62, %cst_29 {dimension_numbers = #tpu.dot_dimension_numbers<[1], [0], [0], [1], [0, 0, 1, 1], [], []>} : vector<16x16xf32>, vector<16x16xf32>, vector<16x16xf32> -> vector<16x16xf32>
    %c0_30 = arith.constant 0 : index
    %c48 = arith.constant 48 : index
    %75 = vector.load %arg8[%c0_30, %c48] : memref<16x128xf32, #tpu.memory_space<vmem>>, vector<16x16xf32>
    tpu.vector_store %arg8[%c0_30, %c48], %74 {strides = array<i32>} : memref<16x128xf32, #tpu.memory_space<vmem>>, vector<16x16xf32>,
    %76 = vector.extract_strided_slice %3 {offsets = [0, 64], sizes = [16, 16], strides = [1, 1]} : vector<16x384xf32> to vector<16x16xf32>
    %77 = vector.extract_strided_slice %4 {offsets = [0, 64], sizes = [16, 16], strides = [1, 1]} : vector<16x128xf32> to vector<16x16xf32>
    %78 = vector.extract_strided_slice %5 {offsets = [0, 64], sizes = [16, 16], strides = [1, 1]} : vector<16x128xf32> to vector<16x16xf32>
    %cst_31 = arith.constant dense<0.000000e+00> : vector<16x16xf32>
    %79 = tpu.matmul %76, %77, %cst_31 {dimension_numbers = #tpu.dot_dimension_numbers<[1], [1], [0], [0], [0, 0, 1, 0], [], []>} : vector<16x16xf32>, vector<16x16xf32>, vector<16x16xf32> -> vector<16x16xf32>
    %cst_32 = arith.constant dense<0xFF800000> : vector<16xf32>
    %80 = vector.multi_reduction <maximumf>, %79, %cst_32 [1] : vector<16x16xf32> to vector<16xf32>
    %81 = vector.shape_cast %80 : vector<16xf32> to vector<16x1xf32>
    %82 = vector.broadcast %81 : vector<16x1xf32> to vector<16x16xf32>
    %83 = arith.subf %79, %82 : vector<16x16xf32>
    %84 = math.exp %83 : vector<16x16xf32>
    %cst_33 = arith.constant dense<0.000000e+00> : vector<16xf32>
    %85 = vector.multi_reduction <add>, %84, %cst_33 [1] : vector<16x16xf32> to vector<16xf32>
    %86 = vector.shape_cast %85 : vector<16xf32> to vector<16x1xf32>
    %87 = tpu.reciprocal %86 {approx = true} : vector<16x1xf32> -> vector<16x1xf32>
    %88 = vector.broadcast %87 : vector<16x1xf32> to vector<16x16xf32>
    %89 = arith.mulf %84, %88 : vector<16x16xf32>
    %cst_34 = arith.constant dense<0.000000e+00> : vector<16x16xf32>
    %90 = tpu.matmul %89, %78, %cst_34 {dimension_numbers = #tpu.dot_dimension_numbers<[1], [0], [0], [1], [0, 0, 1, 1], [], []>} : vector<16x16xf32>, vector<16x16xf32>, vector<16x16xf32> -> vector<16x16xf32>
    %c0_35 = arith.constant 0 : index
    %c64 = arith.constant 64 : index
    %91 = vector.load %arg8[%c0_35, %c64] : memref<16x128xf32, #tpu.memory_space<vmem>>, vector<16x16xf32>
    tpu.vector_store %arg8[%c0_35, %c64], %90 {strides = array<i32>} : memref<16x128xf32, #tpu.memory_space<vmem>>, vector<16x16xf32>,
    %92 = vector.extract_strided_slice %3 {offsets = [0, 80], sizes = [16, 16], strides = [1, 1]} : vector<16x384xf32> to vector<16x16xf32>
    %93 = vector.extract_strided_slice %4 {offsets = [0, 80], sizes = [16, 16], strides = [1, 1]} : vector<16x128xf32> to vector<16x16xf32>
    %94 = vector.extract_strided_slice %5 {offsets = [0, 80], sizes = [16, 16], strides = [1, 1]} : vector<16x128xf32> to vector<16x16xf32>
    %cst_36 = arith.constant dense<0.000000e+00> : vector<16x16xf32>
    %95 = tpu.matmul %92, %93, %cst_36 {dimension_numbers = #tpu.dot_dimension_numbers<[1], [1], [0], [0], [0, 0, 1, 0], [], []>} : vector<16x16xf32>, vector<16x16xf32>, vector<16x16xf32> -> vector<16x16xf32>
    %cst_37 = arith.constant dense<0xFF800000> : vector<16xf32>
    %96 = vector.multi_reduction <maximumf>, %95, %cst_37 [1] : vector<16x16xf32> to vector<16xf32>
    %97 = vector.shape_cast %96 : vector<16xf32> to vector<16x1xf32>
    %98 = vector.broadcast %97 : vector<16x1xf32> to vector<16x16xf32>
    %99 = arith.subf %95, %98 : vector<16x16xf32>
    %100 = math.exp %99 : vector<16x16xf32>
    %cst_38 = arith.constant dense<0.000000e+00> : vector<16xf32>
    %101 = vector.multi_reduction <add>, %100, %cst_38 [1] : vector<16x16xf32> to vector<16xf32>
    %102 = vector.shape_cast %101 : vector<16xf32> to vector<16x1xf32>
    %103 = tpu.reciprocal %102 {approx = true} : vector<16x1xf32> -> vector<16x1xf32>
    %104 = vector.broadcast %103 : vector<16x1xf32> to vector<16x16xf32>
    %105 = arith.mulf %100, %104 : vector<16x16xf32>
    %cst_39 = arith.constant dense<0.000000e+00> : vector<16x16xf32>
    %106 = tpu.matmul %105, %94, %cst_39 {dimension_numbers = #tpu.dot_dimension_numbers<[1], [0], [0], [1], [0, 0, 1, 1], [], []>} : vector<16x16xf32>, vector<16x16xf32>, vector<16x16xf32> -> vector<16x16xf32>
    %c0_40 = arith.constant 0 : index
    %c80 = arith.constant 80 : index
    %107 = vector.load %arg8[%c0_40, %c80] : memref<16x128xf32, #tpu.memory_space<vmem>>, vector<16x16xf32>
    tpu.vector_store %arg8[%c0_40, %c80], %106 {strides = array<i32>} : memref<16x128xf32, #tpu.memory_space<vmem>>, vector<16x16xf32>,
    %108 = vector.extract_strided_slice %3 {offsets = [0, 96], sizes = [16, 16], strides = [1, 1]} : vector<16x384xf32> to vector<16x16xf32>
    %109 = vector.extract_strided_slice %4 {offsets = [0, 96], sizes = [16, 16], strides = [1, 1]} : vector<16x128xf32> to vector<16x16xf32>
    %110 = vector.extract_strided_slice %5 {offsets = [0, 96], sizes = [16, 16], strides = [1, 1]} : vector<16x128xf32> to vector<16x16xf32>
    %cst_41 = arith.constant dense<0.000000e+00> : vector<16x16xf32>
    %111 = tpu.matmul %108, %109, %cst_41 {dimension_numbers = #tpu.dot_dimension_numbers<[1], [1], [0], [0], [0, 0, 1, 0], [], []>} : vector<16x16xf32>, vector<16x16xf32>, vector<16x16xf32> -> vector<16x16xf32>
    %cst_42 = arith.constant dense<0xFF800000> : vector<16xf32>
    %112 = vector.multi_reduction <maximumf>, %111, %cst_42 [1] : vector<16x16xf32> to vector<16xf32>
    %113 = vector.shape_cast %112 : vector<16xf32> to vector<16x1xf32>
    %114 = vector.broadcast %113 : vector<16x1xf32> to vector<16x16xf32>
    %115 = arith.subf %111, %114 : vector<16x16xf32>
    %116 = math.exp %115 : vector<16x16xf32>
    %cst_43 = arith.constant dense<0.000000e+00> : vector<16xf32>
    %117 = vector.multi_reduction <add>, %116, %cst_43 [1] : vector<16x16xf32> to vector<16xf32>
    %118 = vector.shape_cast %117 : vector<16xf32> to vector<16x1xf32>
    %119 = tpu.reciprocal %118 {approx = true} : vector<16x1xf32> -> vector<16x1xf32>
    %120 = vector.broadcast %119 : vector<16x1xf32> to vector<16x16xf32>
    %121 = arith.mulf %116, %120 : vector<16x16xf32>
    %cst_44 = arith.constant dense<0.000000e+00> : vector<16x16xf32>
    %122 = tpu.matmul %121, %110, %cst_44 {dimension_numbers = #tpu.dot_dimension_numbers<[1], [0], [0], [1], [0, 0, 1, 1], [], []>} : vector<16x16xf32>, vector<16x16xf32>, vector<16x16xf32> -> vector<16x16xf32>
    %c0_45 = arith.constant 0 : index
    %c96 = arith.constant 96 : index
    %123 = vector.load %arg8[%c0_45, %c96] : memref<16x128xf32, #tpu.memory_space<vmem>>, vector<16x16xf32>
    tpu.vector_store %arg8[%c0_45, %c96], %122 {strides = array<i32>} : memref<16x128xf32, #tpu.memory_space<vmem>>, vector<16x16xf32>,
    %124 = vector.extract_strided_slice %3 {offsets = [0, 112], sizes = [16, 16], strides = [1, 1]} : vector<16x384xf32> to vector<16x16xf32>
    %125 = vector.extract_strided_slice %4 {offsets = [0, 112], sizes = [16, 16], strides = [1, 1]} : vector<16x128xf32> to vector<16x16xf32>
    %126 = vector.extract_strided_slice %5 {offsets = [0, 112], sizes = [16, 16], strides = [1, 1]} : vector<16x128xf32> to vector<16x16xf32>
    %cst_46 = arith.constant dense<0.000000e+00> : vector<16x16xf32>
    %127 = tpu.matmul %124, %125, %cst_46 {dimension_numbers = #tpu.dot_dimension_numbers<[1], [1], [0], [0], [0, 0, 1, 0], [], []>} : vector<16x16xf32>, vector<16x16xf32>, vector<16x16xf32> -> vector<16x16xf32>
    %cst_47 = arith.constant dense<0xFF800000> : vector<16xf32>
    %128 = vector.multi_reduction <maximumf>, %127, %cst_47 [1] : vector<16x16xf32> to vector<16xf32>
    %129 = vector.shape_cast %128 : vector<16xf32> to vector<16x1xf32>
    %130 = vector.broadcast %129 : vector<16x1xf32> to vector<16x16xf32>
    %131 = arith.subf %127, %130 : vector<16x16xf32>
    %132 = math.exp %131 : vector<16x16xf32>
    %cst_48 = arith.constant dense<0.000000e+00> : vector<16xf32>
    %133 = vector.multi_reduction <add>, %132, %cst_48 [1] : vector<16x16xf32> to vector<16xf32>
    %134 = vector.shape_cast %133 : vector<16xf32> to vector<16x1xf32>
    %135 = tpu.reciprocal %134 {approx = true} : vector<16x1xf32> -> vector<16x1xf32>
    %136 = vector.broadcast %135 : vector<16x1xf32> to vector<16x16xf32>
    %137 = arith.mulf %132, %136 : vector<16x16xf32>
    %cst_49 = arith.constant dense<0.000000e+00> : vector<16x16xf32>
    %138 = tpu.matmul %137, %126, %cst_49 {dimension_numbers = #tpu.dot_dimension_numbers<[1], [0], [0], [1], [0, 0, 1, 1], [], []>} : vector<16x16xf32>, vector<16x16xf32>, vector<16x16xf32> -> vector<16x16xf32>
    %c0_50 = arith.constant 0 : index
    %c112 = arith.constant 112 : index
    %139 = vector.load %arg8[%c0_50, %c112] : memref<16x128xf32, #tpu.memory_space<vmem>>, vector<16x16xf32>
    tpu.vector_store %arg8[%c0_50, %c112], %138 {strides = array<i32>} : memref<16x128xf32, #tpu.memory_space<vmem>>, vector<16x16xf32>,
    %c0_51 = arith.constant 0 : index
    %c0_52 = arith.constant 0 : index
    %140 = vector.load %arg8[%c0_51, %c0_52] : memref<16x128xf32, #tpu.memory_space<vmem>>, vector<16x128xf32>
    %c0_53 = arith.constant 0 : index
    %c0_54 = arith.constant 0 : index
    %141 = vector.load %arg3[%c0_53, %c0_54] : memref<128x128xf32, #tpu.memory_space<vmem>>, vector<128x128xf32>
    %cst_55 = arith.constant dense<0.000000e+00> : vector<16x128xf32>
    %142 = tpu.matmul %140, %141, %cst_55 {dimension_numbers = #tpu.dot_dimension_numbers<[1], [0], [0], [1], [0, 0, 1, 1], [], []>} : vector<16x128xf32>, vector<128x128xf32>, vector<16x128xf32> -> vector<16x128xf32>
    %c0_56 = arith.constant 0 : index
    %c0_57 = arith.constant 0 : index
    %143 = vector.load %arg4[%c0_56, %c0_57] : memref<1x128xf32, #tpu.memory_space<vmem>>, vector<1x128xf32>
    %144 = vector.broadcast %143 : vector<1x128xf32> to vector<16x128xf32>
    %145 = arith.addf %142, %144 : vector<16x128xf32>
    %c0_58 = arith.constant 0 : index
    %c0_59 = arith.constant 0 : index
    %c0_60 = arith.constant 0 : index
    %146 = vector.load %arg5[%c0_58, %c0_59, %c0_60] : memref<1x16x128xf32, #tpu.memory_space<vmem>>, vector<1x16x128xf32>
    %147 = vector.shape_cast %146 : vector<1x16x128xf32> to vector<16x128xf32>
    %148 = vector.shape_cast %145 : vector<16x128xf32> to vector<1x16x128xf32>
    tpu.vector_store %arg5[%c0_58, %c0_59, %c0_60], %148 {strides = array<i32>} : memref<1x16x128xf32, #tpu.memory_space<vmem>>, vector<1x16x128xf32>,
    return
  }
  func.func @transform_0(%arg0: i32) -> (i32, i32, i32) {
    %c0_i32 = arith.constant 0 : i32
    %c0_i32_0 = arith.constant 0 : i32
    %c0_i32_1 = arith.constant 0 : i32
    return %arg0, %c0_i32, %c0_i32_0 : i32, i32, i32
  }
  func.func @transform_1(%arg0: i32) -> (i32, i32) {
    %c0_i32 = arith.constant 0 : i32
    %c0_i32_0 = arith.constant 0 : i32
    %c0_i32_1 = arith.constant 0 : i32
    return %c0_i32, %c0_i32_0 : i32, i32
  }
  func.func @transform_2(%arg0: i32) -> (i32, i32) {
    %c0_i32 = arith.constant 0 : i32
    %c0_i32_0 = arith.constant 0 : i32
    %c0_i32_1 = arith.constant 0 : i32
    return %c0_i32, %c0_i32_0 : i32, i32
  }
  func.func @transform_3(%arg0: i32) -> (i32, i32) {
    %c0_i32 = arith.constant 0 : i32
    %c0_i32_0 = arith.constant 0 : i32
    %c0_i32_1 = arith.constant 0 : i32
    return %c0_i32, %c0_i32_0 : i32, i32
  }
  func.func @transform_4(%arg0: i32) -> (i32, i32, i32) {
    %c0_i32 = arith.constant 0 : i32
    %c0_i32_0 = arith.constant 0 : i32
    %c0_i32_1 = arith.constant 0 : i32
    return %arg0, %c0_i32, %c0_i32_0 : i32, i32, i32
  }
  func.func @transform_5(%arg0: i32) -> (i32, i32, i32) {
    %c0_i32 = arith.constant 0 : i32
    %c0_i32_0 = arith.constant 0 : i32
    %c0_i32_1 = arith.constant 0 : i32
    return %arg0, %c0_i32, %c0_i32_0 : i32, i32, i32
  }
  func.func @transform_6(%arg0: i32) -> (i32, i32, i32) {
    %c0_i32 = arith.constant 0 : i32
    %c0_i32_0 = arith.constant 0 : i32
    %c0_i32_1 = arith.constant 0 : i32
    return %arg0, %c0_i32, %c0_i32_0 : i32, i32, i32
  }
}

</mosaic_0001>

<llo_original>
// kernel: tpu_custom_call.1
$region0: #{tpu_custom_call.1}
  #allocation0 [shape = 'u32[]', space=smem, size = 0x4, offset = 0x4, fixed_abs, tag = 'smem constant byte address 0x4 - core index']
  #allocation1 [shape = 'u32[72,128]{1,0:T(1,128)}', space=vmem, size = 0x9000, scoped, tag = 'internal scratch']
  #allocation2 [shape = 'f32[16,128]{1,0:T(8,128)}', space=vmem, size = 0x2000, scoped, tag = 'scratch operand']
  %s0 = inlined_call_operand.hbm [shape: f32[2,16,128], index: 0, kind: input, shape index: {}]
  %s1 = inlined_call_operand.hbm [shape: f32[128,384], index: 1, kind: input, shape index: {}]
  %s2 = inlined_call_operand.hbm [shape: f32[128,128], index: 2, kind: input, shape index: {}]
  %s3 = inlined_call_operand.vmem [shape: f32[1,128], index: 3, kind: input, shape index: {}]
  %s4 = inlined_call_operand.hbm [shape: f32[2,16,128], index: 4, kind: output, shape index: {0}]
  %s5 = inlined_call_operand.hbm [shape: f32[2,16,128], index: 5, kind: output, shape index: {1}]
  %s6 = inlined_call_operand.hbm [shape: f32[2,16,128], index: 6, kind: output, shape index: {2}]
  %7 = xla_tuple %s4, %s5, %s6
  %s8 = sld [smem:[#allocation0]]
  $region77: #{tpu_custom_call.1} parent=0
    _
  %s10 = ssub.s32 1, %s8
  %s11 = scalar_select 0, %s10, %s8
  $region1: #{tpu_custom_call.1} parent=0
    #allocation3 [shape = 'u8[16384]{0}', space=vmem, size = 0x4000, scoped, tag = 'input window, operand 0']
    #allocation4 [shape = 's32[2]{0}', space=sflag, size = 0x8, scoped, tag = 'scoped memory for tpu_custom_call.1']
    #allocation5 [shape = 's32[2]{0}', space=sflag, size = 0x8, scoped, tag = 'scoped memory for tpu_custom_call.1']
    #allocation6 [shape = 'u8[196608]{0}', space=vmem, size = 0x30000, scoped, tag = 'input window, operand 1, single buffered']
    #allocation7 [shape = 's32[1]{0}', space=sflag, size = 0x4, scoped, tag = 'scoped memory for tpu_custom_call.1']
    #allocation8 [shape = 'u8[65536]{0}', space=vmem, size = 0x10000, scoped, tag = 'input window, operand 2, single buffered']
    #allocation9 [shape = 'u8[16384]{0}', space=vmem, size = 0x4000, scoped, tag = 'output window, operand 0']
    #allocation10 [shape = 'u8[16384]{0}', space=vmem, size = 0x4000, scoped, tag = 'output window, operand 1']
    #allocation11 [shape = 's32[2]{0}', space=sflag, size = 0x8, scoped, tag = 'scoped memory for tpu_custom_call.1']
    #allocation12 [shape = 'u8[16384]{0}', space=vmem, size = 0x4000, scoped, tag = 'output window, operand 2']
    %12 = vsyncpa [#allocation4], 0
    %s13 = scalar_lea.sflag [#allocation4], 1
    %14 = vsyncpa %s13, 0
    %15 = vsyncpa [#allocation7], 0
    %16 = vsyncpa [#allocation5], 0
    %s17 = scalar_lea.sflag [#allocation5], 1
    %18 = vsyncpa %s17, 0
    %19 = vsyncpa [#allocation11], 0
    %s20 = scalar_lea.sflag [#allocation11], 1
    %21 = vsyncpa %s20, 0
    loop: start=0, step=1, limit=4
    $region2: #{tpu_custom_call.1} parent=1 // loop_pre_header
      _
    $region3: #{tpu_custom_call.1} parent=1 // loop_header
      %s23 = sphi 0, %s27
      %p24 = scmp.ge.s32.totalorder %s23, 4
      %s33 = sphi 0, %s35
      %s36 = sphi 0, %s33
      %s37 = sphi 0, %s36
      %s53 = sphi 0, %s37
      %s57 = sphi 0, %s57
      %s59 = sphi 0, %s57
      %s60 = sphi 0, %s59
      %s74 = sphi 0, %s60
      %s78 = sphi 0, %s78
      %s80 = sphi 0, %s78
      %s81 = sphi 0, %s80
      %s95 = sphi 0, %s81
      %s99 = sphi 0, %s99
      %s101 = sphi 0, %s99
      %s102 = sphi 0, %s101
      %s116 = sphi 0, %s102
      %s122 = sphi 0, %s124
      %s125 = sphi 0, %s122
      %s126 = sphi 0, %s125
      %s142 = sphi 0, %s126
      %s148 = sphi 0, %s150
      %s151 = sphi 0, %s148
      %s152 = sphi 0, %s151
      %s168 = sphi 0, %s152
      %s174 = sphi 0, %s176
      %s177 = sphi 0, %s174
      %s178 = sphi 0, %s177
      %s194 = sphi 0, %s178
    $region4: #{tpu_custom_call.1} parent=1 // loop_header_branch
      %26 = sbr.rel (%p24) target = $region8
    $region5: #{tpu_custom_call.1} parent=1 // loop_body
      %s28 = ssub.s32 %s23, 1
      %s29 = ssub.s32 %s23, 2
      %s30 = sadd.s32 %s23, 1
      %s31 = ssub.s32 %s23, %s30
      %p32 = scmp.eq.s32.totalorder %s31, 0
      %s34 = sadd.s32 %s33, 1
      %s35 = scalar_select %p32, %s33, %s34
      %p38 = pneg %p32
      %p39 = scmp.eq.s32.totalorder %s23, 1
      %p40 = por %p38, %p39
      %p41 = scmp.ne.s32.totalorder %s33, %s36
      %p42 = scmp.eq.s32.totalorder %s23, 0
      %p43 = por %p41, %p42
      %p44 = scmp.ne.s32.totalorder %s33, %s36
      %p45 = scmp.eq.s32.totalorder %s28, 1
      %p46 = por %p44, %p45
      %p47 = scmp.ne.s32.totalorder %s36, %s37
      %p48 = scmp.eq.s32.totalorder %s28, 0
      %p49 = por %p47, %p48
      %p50 = scmp.ne.s32.totalorder %s36, %s37
      %p51 = scmp.eq.s32.totalorder %s29, 1
      %p52 = por %p50, %p51
      %p54 = scmp.ne.s32.totalorder %s37, %s53
      %p55 = scmp.eq.s32.totalorder %s29, 0
      %p56 = por %p54, %p55
      %s58 = sadd.s32 %s57, 1
      %p61 = scmp.eq.s32.totalorder %s23, 1
      %p62 = scmp.ne.s32.totalorder %s57, %s59
      %p63 = scmp.eq.s32.totalorder %s23, 0
      %p64 = por %p62, %p63
      %p65 = scmp.ne.s32.totalorder %s57, %s59
      %p66 = scmp.eq.s32.totalorder %s28, 1
      %p67 = por %p65, %p66
      %p68 = scmp.ne.s32.totalorder %s59, %s60
      %p69 = scmp.eq.s32.totalorder %s28, 0
      %p70 = por %p68, %p69
      %p71 = scmp.ne.s32.totalorder %s59, %s60
      %p72 = scmp.eq.s32.totalorder %s29, 1
      %p73 = por %p71, %p72
      %p75 = scmp.ne.s32.totalorder %s60, %s74
      %p76 = scmp.eq.s32.totalorder %s29, 0
      %p77 = por %p75, %p76
      %s79 = sadd.s32 %s78, 1
      %p82 = scmp.eq.s32.totalorder %s23, 1
      %p83 = scmp.ne.s32.totalorder %s78, %s80
      %p84 = scmp.eq.s32.totalorder %s23, 0
      %p85 = por %p83, %p84
      %p86 = scmp.ne.s32.totalorder %s78, %s80
      %p87 = scmp.eq.s32.totalorder %s28, 1
      %p88 = por %p86, %p87
      %p89 = scmp.ne.s32.totalorder %s80, %s81
      %p90 = scmp.eq.s32.totalorder %s28, 0
      %p91 = por %p89, %p90
      %p92 = scmp.ne.s32.totalorder %s80, %s81
      %p93 = scmp.eq.s32.totalorder %s29, 1
      %p94 = por %p92, %p93
      %p96 = scmp.ne.s32.totalorder %s81, %s95
      %p97 = scmp.eq.s32.totalorder %s29, 0
      %p98 = por %p96, %p97
      %s100 = sadd.s32 %s99, 1
      %p103 = scmp.eq.s32.totalorder %s23, 1
      %p104 = scmp.ne.s32.totalorder %s99, %s101
      %p105 = scmp.eq.s32.totalorder %s23, 0
      %p106 = por %p104, %p105
      %p107 = scmp.ne.s32.totalorder %s99, %s101
      %p108 = scmp.eq.s32.totalorder %s28, 1
      %p109 = por %p107, %p108
      %p110 = scmp.ne.s32.totalorder %s101, %s102
      %p111 = scmp.eq.s32.totalorder %s28, 0
      %p112 = por %p110, %p111
      %p113 = scmp.ne.s32.totalorder %s101, %s102
      %p114 = scmp.eq.s32.totalorder %s29, 1
      %p115 = por %p113, %p114
      %p117 = scmp.ne.s32.totalorder %s102, %s116
      %p118 = scmp.eq.s32.totalorder %s29, 0
      %p119 = por %p117, %p118
      %s120 = ssub.s32 %s23, %s30
      %p121 = scmp.eq.s32.totalorder %s120, 0
      %s123 = sadd.s32 %s122, 1
      %s124 = scalar_select %p121, %s122, %s123
      %p127 = pneg %p121
      %p128 = scmp.eq.s32.totalorder %s23, 1
      %p129 = por %p127, %p128
      %p130 = scmp.ne.s32.totalorder %s122, %s125
      %p131 = scmp.eq.s32.totalorder %s23, 0
      %p132 = por %p130, %p131
      %p133 = scmp.ne.s32.totalorder %s122, %s125
      %p134 = scmp.eq.s32.totalorder %s28, 1
      %p135 = por %p133, %p134
      %p136 = scmp.ne.s32.totalorder %s125, %s126
      %p137 = scmp.eq.s32.totalorder %s28, 0
      %p138 = por %p136, %p137
      %p139 = scmp.ne.s32.totalorder %s125, %s126
      %p140 = scmp.eq.s32.totalorder %s29, 1
      %p141 = por %p139, %p140
      %p143 = scmp.ne.s32.totalorder %s126, %s142
      %p144 = scmp.eq.s32.totalorder %s29, 0
      %p145 = por %p143, %p144
      %s146 = ssub.s32 %s23, %s30
      %p147 = scmp.eq.s32.totalorder %s146, 0
      %s149 = sadd.s32 %s148, 1
      %s150 = scalar_select %p147, %s148, %s149
      %p153 = pneg %p147
      %p154 = scmp.eq.s32.totalorder %s23, 1
      %p155 = por %p153, %p154
      %p156 = scmp.ne.s32.totalorder %s148, %s151
      %p157 = scmp.eq.s32.totalorder %s23, 0
      %p158 = por %p156, %p157
      %p159 = scmp.ne.s32.totalorder %s148, %s151
      %p160 = scmp.eq.s32.totalorder %s28, 1
      %p161 = por %p159, %p160
      %p162 = scmp.ne.s32.totalorder %s151, %s152
      %p163 = scmp.eq.s32.totalorder %s28, 0
      %p164 = por %p162, %p163
      %p165 = scmp.ne.s32.totalorder %s151, %s152
      %p166 = scmp.eq.s32.totalorder %s29, 1
      %p167 = por %p165, %p166
      %p169 = scmp.ne.s32.totalorder %s152, %s168
      %p170 = scmp.eq.s32.totalorder %s29, 0
      %p171 = por %p169, %p170
      %s172 = ssub.s32 %s23, %s30
      %p173 = scmp.eq.s32.totalorder %s172, 0
      %s175 = sadd.s32 %s174, 1
      %s176 = scalar_select %p173, %s174, %s175
      %p179 = pneg %p173
      %p180 = scmp.eq.s32.totalorder %s23, 1
      %p181 = por %p179, %p180
      %p182 = scmp.ne.s32.totalorder %s174, %s177
      %p183 = scmp.eq.s32.totalorder %s23, 0
      %p184 = por %p182, %p183
      %p185 = scmp.ne.s32.totalorder %s174, %s177
      %p186 = scmp.eq.s32.totalorder %s28, 1
      %p187 = por %p185, %p186
      %p188 = scmp.ne.s32.totalorder %s177, %s178
      %p189 = scmp.eq.s32.totalorder %s28, 0
      %p190 = por %p188, %p189
      %p191 = scmp.ne.s32.totalorder %s177, %s178
      %p192 = scmp.eq.s32.totalorder %s29, 1
      %p193 = por %p191, %p192
      %p195 = scmp.ne.s32.totalorder %s178, %s194
      %p196 = scmp.eq.s32.totalorder %s29, 0
      %p197 = por %p195, %p196
      %p198 = scmp.le.s32.totalorder 1, %s23
      %p199 = scmp.lt.s32.totalorder %s23, 3
      %p200 = pnand %p198, %p199
      %p201 = pneg %p200
      // Predicated region
      $region9: #{tpu_custom_call.1} parent=5 // pred_check
        _
      $region10: #{tpu_custom_call.1} parent=5 // pred_check_branch
        %203 = sbr.rel (%p200) target = $region12
      $region11: #{tpu_custom_call.1} parent=5 // pred_region
        %s204 = ssub.s32 %s23, 1
        // Predicated region
        $region13: #{tpu_custom_call.1} parent=11 // pred_check
          %p205 = pneg %p70
        $region14: #{tpu_custom_call.1} parent=11 // pred_check_branch
          %207 = sbr.rel (%p205) target = $region16
        $region15: #{tpu_custom_call.1} parent=11 // pred_region
          %209 = vsyncadd [#allocation7], 0
          %s210 = sshll.u32 %s1, 4
          %s211 = int_to_ptr.hbm [resolvable:$true] %s210
          %s212 = sshll.u32 [#allocation6], 4
          %s213 = int_to_ptr.vmem [resolvable:$true] %s212
          %218 = dma.hbm_to_vmem [thread:$0]  %s211, 6144, %s213, [#allocation7], 384, 384, 24
        $region16: #{tpu_custom_call.1} parent=11 // pred_fallthru
          _
        // Predicated region
        $region17: #{tpu_custom_call.1} parent=11 // pred_check
          %p219 = pneg %p91
        $region18: #{tpu_custom_call.1} parent=11 // pred_check_branch
          %221 = sbr.rel (%p219) target = $region20
        $region19: #{tpu_custom_call.1} parent=11 // pred_region
          %223 = vsyncadd [#allocation7], 0
          %s224 = sshll.u32 %s2, 4
          %s225 = int_to_ptr.hbm [resolvable:$true] %s224
          %s226 = sshll.u32 [#allocation8], 4
          %s227 = int_to_ptr.vmem [resolvable:$true] %s226
          %232 = dma.hbm_to_vmem [thread:$0]  %s225, 2048, %s227, [#allocation7], 128, 128, 8
        $region20: #{tpu_custom_call.1} parent=11 // pred_fallthru
          _
        // Predicated region
        $region21: #{tpu_custom_call.1} parent=11 // pred_check
          %p233 = pneg %p112
        $region22: #{tpu_custom_call.1} parent=11 // pred_check_branch
          %235 = sbr.rel (%p233) target = $region24
        $region23: #{tpu_custom_call.1} parent=11 // pred_region
          _
        $region24: #{tpu_custom_call.1} parent=11 // pred_fallthru
          _
      $region12: #{tpu_custom_call.1} parent=5 // pred_fallthru
        _
      %p236 = scmp.lt.s32.totalorder %s23, 2
      // Predicated region
      $region25: #{tpu_custom_call.1} parent=5 // pred_check
        %p237 = pneg %p236
      $region26: #{tpu_custom_call.1} parent=5 // pred_check_branch
        %239 = sbr.rel (%p237) target = $region28
      $region27: #{tpu_custom_call.1} parent=5 // pred_region
        // Predicated region
        $region29: #{tpu_custom_call.1} parent=27 // pred_check
          %p240 = pneg %p43
        $region30: #{tpu_custom_call.1} parent=27 // pred_check_branch
          %242 = sbr.rel (%p240) target = $region32
        $region31: #{tpu_custom_call.1} parent=27 // pred_region
          %s243 = sand.u32 %s33, 1
          %s244 = scalar_lea.sflag [#allocation4], %s243
          %s245 = sand.u32 %s33, 1
          %s246 = smul.addr %s245, 16
          %s247 = scalar_lea.vmem [#allocation3], %s246
          %249 = vsyncadd %s244, 0
          %s250 = smul.addr %s23, 2
          %s251 = smul.addr %s250, 8
          %s252 = scalar_lea.hbm %s0, %s251
          %s253 = sshll.u32 %s252, 4
          %s254 = int_to_ptr.hbm [resolvable:$true] %s253
          %s255 = sshll.u32 %s247, 4
          %s256 = int_to_ptr.vmem [resolvable:$true] %s255
          %261 = dma.hbm_to_vmem [thread:$0]  %s254, 256, %s256, %s244, 128, 128, 8
        $region32: #{tpu_custom_call.1} parent=27 // pred_fallthru
          _
      $region28: #{tpu_custom_call.1} parent=5 // pred_fallthru
        _
      %p262 = scmp.le.s32.totalorder 1, %s23
      %p263 = scmp.lt.s32.totalorder %s23, 3
      %p264 = pnand %p262, %p263
      %p265 = pneg %p264
      // Predicated region
      $region33: #{tpu_custom_call.1} parent=5 // pred_check
        _
      $region34: #{tpu_custom_call.1} parent=5 // pred_check_branch
        %267 = sbr.rel (%p264) target = $region36
      $region35: #{tpu_custom_call.1} parent=5 // pred_region
        %s268 = ssub.s32 %s23, 1
        %s269 = sand.u32 %s36, 1
        %s270 = scalar_lea.sflag [#allocation4], %s269
        %s271 = sand.u32 %s36, 1
        %s272 = smul.addr %s271, 16
        %s273 = scalar_lea.vmem [#allocation3], %s272
        // Predicated region
        $region37: #{tpu_custom_call.1} parent=35 // pred_check
          %p274 = pneg %p49
        $region38: #{tpu_custom_call.1} parent=35 // pred_check_branch
          %276 = sbr.rel (%p274) target = $region40
        $region39: #{tpu_custom_call.1} parent=35 // pred_region
          %278 = dma.done %s270, 256
        $region40: #{tpu_custom_call.1} parent=35 // pred_fallthru
          _
        // Predicated region
        $region41: #{tpu_custom_call.1} parent=35 // pred_check
          %p279 = pneg %p70
        $region42: #{tpu_custom_call.1} parent=35 // pred_check_branch
          %281 = sbr.rel (%p279) target = $region44
        $region43: #{tpu_custom_call.1} parent=35 // pred_region
          %283 = dma.done [#allocation7], 6144
        $region44: #{tpu_custom_call.1} parent=35 // pred_fallthru
          _
        // Predicated region
        $region45: #{tpu_custom_call.1} parent=35 // pred_check
          %p284 = pneg %p91
        $region46: #{tpu_custom_call.1} parent=35 // pred_check_branch
          %286 = sbr.rel (%p284) target = $region48
        $region47: #{tpu_custom_call.1} parent=35 // pred_region
          %288 = dma.done [#allocation7], 2048
        $region48: #{tpu_custom_call.1} parent=35 // pred_fallthru
          _
        %s289 = sand.u32 %s36, 1
        %s290 = scalar_lea.sflag [#allocation4], %s289
        %s291 = sand.u32 %s36, 1
        %s292 = smul.addr %s291, 16
        %s293 = scalar_lea.vmem [#allocation3], %s292
        %p294 = pneg %p49
        %p295 = pneg %p46
        %p296 = pneg %p70
        %p297 = pneg %p67
        %p298 = pneg %p91
        %p299 = pneg %p88
        %p300 = pneg %p112
        %p301 = pneg %p109
        %p302 = pneg %p138
        %p303 = pneg %p135
        %s304 = sand.u32 %s125, 1
        %s305 = scalar_lea.sflag [#allocation5], %s304
        %s306 = sand.u32 %s125, 1
        %s307 = smul.addr %s306, 16
        %s308 = scalar_lea.vmem [#allocation9], %s307
        %p309 = pneg %p164
        %p310 = pneg %p161
        %s311 = sand.u32 %s28, 1
        %s312 = scalar_lea.sflag [#allocation11], %s311
        %s313 = sand.u32 %s151, 1
        %s314 = smul.addr %s313, 16
        %s315 = scalar_lea.vmem [#allocation10], %s314
        %p316 = pneg %p190
        %p317 = pneg %p187
        %s318 = sand.u32 %s28, 1
        %s319 = scalar_lea.sflag [#allocation11], %s318
        %s320 = sand.u32 %s177, 1
        %s321 = smul.addr %s320, 16
        %s322 = scalar_lea.vmem [#allocation12], %s321
        %v323 = vld [vmem:[%s273] sm:$0xff]
        %v324 = vld [vmem:[%s273 + $0x8] sm:$0xff]
        %v325 = vld [vmem:[#allocation6] sm:$0xff]
        %v326 = vld [vmem:[#allocation6 + $0x8] sm:$0xff]
        %v327 = vld [vmem:[#allocation6 + $0x10] sm:$0xff]
        %v328 = vld [vmem:[#allocation6 + $0x18] sm:$0xff]
        %v329 = vld [vmem:[#allocation6 + $0x20] sm:$0xff]
        %v330 = vld [vmem:[#allocation6 + $0x28] sm:$0xff]
        %v331 = vld [vmem:[#allocation6 + $0x30] sm:$0xff]
        %v332 = vld [vmem:[#allocation6 + $0x38] sm:$0xff]
        %v333 = vld [vmem:[#allocation6 + $0x40] sm:$0xff]
        %v334 = vld [vmem:[#allocation6 + $0x48] sm:$0xff]
        %v335 = vld [vmem:[#allocation6 + $0x50] sm:$0xff]
        %v336 = vld [vmem:[#allocation6 + $0x58] sm:$0xff]
        %v337 = vld [vmem:[#allocation6 + $0x60] sm:$0xff]
        %v338 = vld [vmem:[#allocation6 + $0x68] sm:$0xff]
        %v339 = vld [vmem:[#allocation6 + $0x70] sm:$0xff]
        %v340 = vld [vmem:[#allocation6 + $0x78] sm:$0xff]
        %v341 = vld [vmem:[#allocation6 + $0x80] sm:$0xff]
        %v342 = vld [vmem:[#allocation6 + $0x88] sm:$0xff]
        %v343 = vld [vmem:[#allocation6 + $0x90] sm:$0xff]
        %v344 = vld [vmem:[#allocation6 + $0x98] sm:$0xff]
        %v345 = vld [vmem:[#allocation6 + $0xa0] sm:$0xff]
        %v346 = vld [vmem:[#allocation6 + $0xa8] sm:$0xff]
        %v347 = vld [vmem:[#allocation6 + $0xb0] sm:$0xff]
        %v348 = vld [vmem:[#allocation6 + $0xb8] sm:$0xff]
        %v349 = vld [vmem:[#allocation6 + $0xc0] sm:$0xff]
        %v350 = vld [vmem:[#allocation6 + $0xc8] sm:$0xff]
        %v351 = vld [vmem:[#allocation6 + $0xd0] sm:$0xff]
        %v352 = vld [vmem:[#allocation6 + $0xd8] sm:$0xff]
        %v353 = vld [vmem:[#allocation6 + $0xe0] sm:$0xff]
        %v354 = vld [vmem:[#allocation6 + $0xe8] sm:$0xff]
        %v355 = vld [vmem:[#allocation6 + $0xf0] sm:$0xff]
        %v356 = vld [vmem:[#allocation6 + $0xf8] sm:$0xff]
        %v357 = vld [vmem:[#allocation6 + $0x100] sm:$0xff]
        %v358 = vld [vmem:[#allocation6 + $0x108] sm:$0xff]
        %v359 = vld [vmem:[#allocation6 + $0x110] sm:$0xff]
        %v360 = vld [vmem:[#allocation6 + $0x118] sm:$0xff]
        %v361 = vld [vmem:[#allocation6 + $0x120] sm:$0xff]
        %v362 = vld [vmem:[#allocation6 + $0x128] sm:$0xff]
        %v363 = vld [vmem:[#allocation6 + $0x130] sm:$0xff]
        %v364 = vld [vmem:[#allocation6 + $0x138] sm:$0xff]
        %v365 = vld [vmem:[#allocation6 + $0x140] sm:$0xff]
        %v366 = vld [vmem:[#allocation6 + $0x148] sm:$0xff]
        %v367 = vld [vmem:[#allocation6 + $0x150] sm:$0xff]
        %v368 = vld [vmem:[#allocation6 + $0x158] sm:$0xff]
        %v369 = vld [vmem:[#allocation6 + $0x160] sm:$0xff]
        %v370 = vld [vmem:[#allocation6 + $0x168] sm:$0xff]
        %v371 = vld [vmem:[#allocation6 + $0x170] sm:$0xff]
        %v372 = vld [vmem:[#allocation6 + $0x178] sm:$0xff]
        %373 = vmatpush.msra.mxu0 %v370
        %374 = vmatpush.msra.mxu0 %v367
        %375 = vmatpush.msra.mxu0 %v364
        %376 = vmatpush.msra.mxu0 %v361
        %377 = vmatpush.msra.mxu0 %v358
        %378 = vmatpush.msra.mxu0 %v355
        %379 = vmatpush.msra.mxu0 %v352
        %380 = vmatpush.msra.mxu0 %v349
        %381 = vmatpush.msra.mxu0 %v346
        %382 = vmatpush.msra.mxu0 %v343
        %383 = vmatpush.msra.mxu0 %v340
        %384 = vmatpush.msra.mxu0 %v337
        %385 = vmatpush.msra.mxu0 %v334
        %386 = vmatpush.msra.mxu0 %v331
        %387 = vmatpush.msra.mxu0 %v328
        %388 = vmatpush.msra.mxu0 %v325
        %389 = vmatmul.f32.gmra.mxu0 %v323
        %v390 = vpop.f32.mrf.mxu0
        %v391 = vadd.f32 0.0, %v390
        %392 = vmatmul.f32.gmra.mxu0 %v324
        %v393 = vpop.f32.mrf.mxu0
        %v394 = vadd.f32 0.0, %v393
        %395 = vdwg.mxu0
        %396 = vmatpush.msra.mxu0 %v371
        %397 = vmatpush.msra.mxu0 %v368
        %398 = vmatpush.msra.mxu0 %v365
        %399 = vmatpush.msra.mxu0 %v362
        %400 = vmatpush.msra.mxu0 %v359
        %401 = vmatpush.msra.mxu0 %v356
        %402 = vmatpush.msra.mxu0 %v353
        %403 = vmatpush.msra.mxu0 %v350
        %404 = vmatpush.msra.mxu0 %v347
        %405 = vmatpush.msra.mxu0 %v344
        %406 = vmatpush.msra.mxu0 %v341
        %407 = vmatpush.msra.mxu0 %v338
        %408 = vmatpush.msra.mxu0 %v335
        %409 = vmatpush.msra.mxu0 %v332
        %410 = vmatpush.msra.mxu0 %v329
        %411 = vmatpush.msra.mxu0 %v326
        %412 = vmatmul.f32.gmra.mxu0 %v323
        %v413 = vpop.f32.mrf.mxu0
        %v414 = vadd.f32 0.0, %v413
        %415 = vmatmul.f32.gmra.mxu0 %v324
        %v416 = vpop.f32.mrf.mxu0
        %v417 = vadd.f32 0.0, %v416
        %418 = vdwg.mxu0
        %419 = vmatpush.msra.mxu0 %v372
        %420 = vmatpush.msra.mxu0 %v369
        %421 = vmatpush.msra.mxu0 %v366
        %422 = vmatpush.msra.mxu0 %v363
        %423 = vmatpush.msra.mxu0 %v360
        %424 = vmatpush.msra.mxu0 %v357
        %425 = vmatpush.msra.mxu0 %v354
        %426 = vmatpush.msra.mxu0 %v351
        %427 = vmatpush.msra.mxu0 %v348
        %428 = vmatpush.msra.mxu0 %v345
        %429 = vmatpush.msra.mxu0 %v342
        %430 = vmatpush.msra.mxu0 %v339
        %431 = vmatpush.msra.mxu0 %v336
        %432 = vmatpush.msra.mxu0 %v333
        %433 = vmatpush.msra.mxu0 %v330
        %434 = vmatpush.msra.mxu0 %v327
        %435 = vmatmul.f32.gmra.mxu0 %v323
        %v436 = vpop.f32.mrf.mxu0
        %v437 = vadd.f32 0.0, %v436
        %438 = vmatmul.f32.gmra.mxu0 %v324
        %v439 = vpop.f32.mrf.mxu0
        %v440 = vadd.f32 0.0, %v439
        %441 = vdwg.mxu0
        %442 = vst [vmem:[%s315] sm:$0xff] %v414
        %443 = vst [vmem:[%s315 + $0x8] sm:$0xff] %v417
        %444 = vst [vmem:[%s322] sm:$0xff] %v437
        %445 = vst [vmem:[%s322 + $0x8] sm:$0xff] %v440
        %vm446 = vcmask 130048
        %v448 = vsel %vm446, %v391, 0
        %v451 = vsel %vm446, %v394, 0
        %v454 = vsel %vm446, %v414, 0
        %v457 = vsel %vm446, %v417, 0
        %459 = vmatpush.xpose.msra.mxu0 0.0
        %460 = vmatpush.xpose.msra.mxu0 0.0
        %461 = vmatpush.xpose.msra.mxu0 0.0
        %462 = vmatpush.xpose.msra.mxu0 0.0
        %463 = vmatpush.xpose.msra.mxu0 0.0
        %464 = vmatpush.xpose.msra.mxu0 0.0
        %465 = vmatpush.xpose.msra.mxu0 0.0
        %466 = vmatpush.xpose.msra.mxu0 0.0
        %467 = vmatpush.xpose.msra.mxu0 0.0
        %468 = vmatpush.xpose.msra.mxu0 0.0
        %469 = vmatpush.xpose.msra.mxu0 0.0
        %470 = vmatpush.xpose.msra.mxu0 0.0
        %471 = vmatpush.xpose.msra.mxu0 0.0
        %472 = vmatpush.xpose.msra.mxu0 0.0
        %473 = vmatpush.xpose.msra.mxu0 %v457
        %474 = vmatpush.xpose.msra.mxu0 %v454
        %475 = vmatmul.f32.gmra.mxu0 %v448
        %v476 = vpop.f32.mrf.mxu0
        %v477 = vadd.f32 0.0, %v476
        %478 = vmatmul.f32.gmra.mxu0 %v451
        %v479 = vpop.f32.mrf.mxu0
        %v480 = vadd.f32 0.0, %v479
        %481 = vdwg.mxu0
        %v482 = vsel %vm446, %v477, -inf
        %483 = vmax.xlane.f32.xlu0 %v482
        %v484 = vpop.xlane.xlu0 %483
        %v485 = vsel %vm446, %v480, -inf
        %486 = vmax.xlane.f32.xlu0 %v485
        %v487 = vpop.xlane.xlu0 %486
        %v488 = vsub.f32 %v477, %v484
        %v489 = vsub.f32 %v480, %v487
        %v490 = vmul.f32 %v488, 1.442695
        %v491 = vpow.pop %v490
        %v492 = vmul.f32 %v489, 1.442695
        %v493 = vpow.pop %v492
        %v494 = vsel %vm446, %v491, 0.0
        %495 = vadd.xlane.f32.xlu0 %v494
        %v496 = vpop.xlane.xlu0 %495
        %v497 = vsel %vm446, %v493, 0.0
        %498 = vadd.xlane.f32.xlu0 %v497
        %v499 = vpop.xlane.xlu0 %498
        %v500 = vrcp.pop %v496
        %v501 = vrcp.pop %v499
        %v502 = vmul.f32 %v491, %v500
        %v503 = vmul.f32 %v493, %v501
        %v505 = vsel %vm446, %v502, 0
        %v508 = vsel %vm446, %v503, 0
        %510 = vmatpush.msra.mxu0 0.0
        %511 = vmatpush.msra.mxu0 0.0
        %512 = vmatpush.msra.mxu0 0.0
        %513 = vmatpush.msra.mxu0 0.0
        %514 = vmatpush.msra.mxu0 0.0
        %515 = vmatpush.msra.mxu0 0.0
        %516 = vmatpush.msra.mxu0 0.0
        %517 = vmatpush.msra.mxu0 0.0
        %518 = vmatpush.msra.mxu0 0.0
        %519 = vmatpush.msra.mxu0 0.0
        %520 = vmatpush.msra.mxu0 0.0
        %521 = vmatpush.msra.mxu0 0.0
        %522 = vmatpush.msra.mxu0 0.0
        %523 = vmatpush.msra.mxu0 0.0
        %524 = vmatpush.msra.mxu0 %v440
        %525 = vmatpush.msra.mxu0 %v437
        %526 = vmatmul.f32.gmra.mxu0 %v505
        %v527 = vpop.f32.mrf.mxu0
        %v528 = vadd.f32 0.0, %v527
        %529 = vmatmul.f32.gmra.mxu0 %v508
        %v530 = vpop.f32.mrf.mxu0
        %v531 = vadd.f32 0.0, %v530
        %532 = vdwg.mxu0
        %533 = vst.msk [vmem:[#allocation2] sm:$0xff] %vm446, %v528
        %534 = vst.msk [vmem:[#allocation2 + $0x8] sm:$0xff] %vm446, %v531
        %535 = vrot.lane.b32.xlu0 %v391, 112
        %v536 = vpop.permute.xlu0 %535
        %537 = vrot.lane.b32.xlu0 %v394, 112
        %v538 = vpop.permute.xlu0 %537
        %539 = vrot.lane.b32.xlu0 %v414, 112
        %v540 = vpop.permute.xlu0 %539
        %541 = vrot.lane.b32.xlu0 %v417, 112
        %v542 = vpop.permute.xlu0 %541
        %v543 = vsel %vm446, %v536, 0
        %v545 = vsel %vm446, %v538, 0
        %v547 = vsel %vm446, %v540, 0
        %v549 = vsel %vm446, %v542, 0
        %551 = vmatpush.xpose.msra.mxu0 0.0
        %552 = vmatpush.xpose.msra.mxu0 0.0
        %553 = vmatpush.xpose.msra.mxu0 0.0
        %554 = vmatpush.xpose.msra.mxu0 0.0
        %555 = vmatpush.xpose.msra.mxu0 0.0
        %556 = vmatpush.xpose.msra.mxu0 0.0
        %557 = vmatpush.xpose.msra.mxu0 0.0
        %558 = vmatpush.xpose.msra.mxu0 0.0
        %559 = vmatpush.xpose.msra.mxu0 0.0
        %560 = vmatpush.xpose.msra.mxu0 0.0
        %561 = vmatpush.xpose.msra.mxu0 0.0
        %562 = vmatpush.xpose.msra.mxu0 0.0
        %563 = vmatpush.xpose.msra.mxu0 0.0
        %564 = vmatpush.xpose.msra.mxu0 0.0
        %565 = vmatpush.xpose.msra.mxu0 %v549
        %566 = vmatpush.xpose.msra.mxu0 %v547
        %567 = vmatmul.f32.gmra.mxu0 %v543
        %v568 = vpop.f32.mrf.mxu0
        %v569 = vadd.f32 0.0, %v568
        %570 = vmatmul.f32.gmra.mxu0 %v545
        %v571 = vpop.f32.mrf.mxu0
        %v572 = vadd.f32 0.0, %v571
        %573 = vdwg.mxu0
        %v574 = vsel %vm446, %v569, -inf
        %575 = vmax.xlane.f32.xlu0 %v574
        %v576 = vpop.xlane.xlu0 %575
        %v577 = vsel %vm446, %v572, -inf
        %578 = vmax.xlane.f32.xlu0 %v577
        %v579 = vpop.xlane.xlu0 %578
        %v580 = vsub.f32 %v569, %v576
        %v581 = vsub.f32 %v572, %v579
        %v582 = vmul.f32 %v580, 1.442695
        %v583 = vpow.pop %v582
        %v584 = vmul.f32 %v581, 1.442695
        %v585 = vpow.pop %v584
        %v586 = vsel %vm446, %v583, 0.0
        %587 = vadd.xlane.f32.xlu0 %v586
        %v588 = vpop.xlane.xlu0 %587
        %v589 = vsel %vm446, %v585, 0.0
        %590 = vadd.xlane.f32.xlu0 %v589
        %v591 = vpop.xlane.xlu0 %590
        %v592 = vrcp.pop %v588
        %v593 = vrcp.pop %v591
        %v594 = vmul.f32 %v583, %v592
        %v595 = vmul.f32 %v585, %v593
        %598 = vrot.lane.b32.xlu0 %v437, 112
        %v599 = vpop.permute.xlu0 %598
        %600 = vrot.lane.b32.xlu0 %v440, 112
        %v601 = vpop.permute.xlu0 %600
        %v605 = vsel %vm446, %v594, 0
        %v608 = vsel %vm446, %v595, 0
        %610 = vmatpush.msra.mxu0 0.0
        %611 = vmatpush.msra.mxu0 0.0
        %612 = vmatpush.msra.mxu0 0.0
        %613 = vmatpush.msra.mxu0 0.0
        %614 = vmatpush.msra.mxu0 0.0
        %615 = vmatpush.msra.mxu0 0.0
        %616 = vmatpush.msra.mxu0 0.0
        %617 = vmatpush.msra.mxu0 0.0
        %618 = vmatpush.msra.mxu0 0.0
        %619 = vmatpush.msra.mxu0 0.0
        %620 = vmatpush.msra.mxu0 0.0
        %621 = vmatpush.msra.mxu0 0.0
        %622 = vmatpush.msra.mxu0 0.0
        %623 = vmatpush.msra.mxu0 0.0
        %624 = vmatpush.msra.mxu0 %v601
        %625 = vmatpush.msra.mxu0 %v599
        %626 = vmatmul.f32.gmra.mxu0 %v605
        %v627 = vpop.f32.mrf.mxu0
        %v628 = vadd.f32 0.0, %v627
        %629 = vmatmul.f32.gmra.mxu0 %v608
        %v630 = vpop.f32.mrf.mxu0
        %v631 = vadd.f32 0.0, %v630
        %632 = vdwg.mxu0
        %635 = vrot.lane.b32.xlu0 %v628, 16
        %v636 = vpop.permute.xlu0 %635
        %637 = vrot.lane.b32.xlu0 %v631, 16
        %v638 = vpop.permute.xlu0 %637
        %vm641 = vcmask 261248
        %642 = vst.msk [vmem:[#allocation2] sm:$0xff] %vm641, %v636
        %643 = vst.msk [vmem:[#allocation2 + $0x8] sm:$0xff] %vm641, %v638
        %644 = vrot.lane.b32.xlu0 %v391, 96
        %v645 = vpop.permute.xlu0 %644
        %646 = vrot.lane.b32.xlu0 %v394, 96
        %v647 = vpop.permute.xlu0 %646
        %648 = vrot.lane.b32.xlu0 %v414, 96
        %v649 = vpop.permute.xlu0 %648
        %650 = vrot.lane.b32.xlu0 %v417, 96
        %v651 = vpop.permute.xlu0 %650
        %v652 = vsel %vm446, %v645, 0
        %v654 = vsel %vm446, %v647, 0
        %v656 = vsel %vm446, %v649, 0
        %v658 = vsel %vm446, %v651, 0
        %660 = vmatpush.xpose.msra.mxu0 0.0
        %661 = vmatpush.xpose.msra.mxu0 0.0
        %662 = vmatpush.xpose.msra.mxu0 0.0
        %663 = vmatpush.xpose.msra.mxu0 0.0
        %664 = vmatpush.xpose.msra.mxu0 0.0
        %665 = vmatpush.xpose.msra.mxu0 0.0
        %666 = vmatpush.xpose.msra.mxu0 0.0
        %667 = vmatpush.xpose.msra.mxu0 0.0
        %668 = vmatpush.xpose.msra.mxu0 0.0
        %669 = vmatpush.xpose.msra.mxu0 0.0
        %670 = vmatpush.xpose.msra.mxu0 0.0
        %671 = vmatpush.xpose.msra.mxu0 0.0
        %672 = vmatpush.xpose.msra.mxu0 0.0
        %673 = vmatpush.xpose.msra.mxu0 0.0
        %674 = vmatpush.xpose.msra.mxu0 %v658
        %675 = vmatpush.xpose.msra.mxu0 %v656
        %676 = vmatmul.f32.gmra.mxu0 %v652
        %v677 = vpop.f32.mrf.mxu0
        %v678 = vadd.f32 0.0, %v677
        %679 = vmatmul.f32.gmra.mxu0 %v654
        %v680 = vpop.f32.mrf.mxu0
        %v681 = vadd.f32 0.0, %v680
        %682 = vdwg.mxu0
        %v683 = vsel %vm446, %v678, -inf
        %684 = vmax.xlane.f32.xlu0 %v683
        %v685 = vpop.xlane.xlu0 %684
        %v686 = vsel %vm446, %v681, -inf
        %687 = vmax.xlane.f32.xlu0 %v686
        %v688 = vpop.xlane.xlu0 %687
        %v689 = vsub.f32 %v678, %v685
        %v690 = vsub.f32 %v681, %v688
        %v691 = vmul.f32 %v689, 1.442695
        %v692 = vpow.pop %v691
        %v693 = vmul.f32 %v690, 1.442695
        %v694 = vpow.pop %v693
        %v695 = vsel %vm446, %v692, 0.0
        %696 = vadd.xlane.f32.xlu0 %v695
        %v697 = vpop.xlane.xlu0 %696
        %v698 = vsel %vm446, %v694, 0.0
        %699 = vadd.xlane.f32.xlu0 %v698
        %v700 = vpop.xlane.xlu0 %699
        %v701 = vrcp.pop %v697
        %v702 = vrcp.pop %v700
        %v703 = vmul.f32 %v692, %v701
        %v704 = vmul.f32 %v694, %v702
        %705 = vrot.lane.b32.xlu0 %v437, 96
        %v706 = vpop.permute.xlu0 %705
        %707 = vrot.lane.b32.xlu0 %v440, 96
        %v708 = vpop.permute.xlu0 %707
        %v712 = vsel %vm446, %v703, 0
        %v715 = vsel %vm446, %v704, 0
        %717 = vmatpush.msra.mxu0 0.0
        %718 = vmatpush.msra.mxu0 0.0
        %719 = vmatpush.msra.mxu0 0.0
        %720 = vmatpush.msra.mxu0 0.0
        %721 = vmatpush.msra.mxu0 0.0
        %722 = vmatpush.msra.mxu0 0.0
        %723 = vmatpush.msra.mxu0 0.0
        %724 = vmatpush.msra.mxu0 0.0
        %725 = vmatpush.msra.mxu0 0.0
        %726 = vmatpush.msra.mxu0 0.0
        %727 = vmatpush.msra.mxu0 0.0
        %728 = vmatpush.msra.mxu0 0.0
        %729 = vmatpush.msra.mxu0 0.0
        %730 = vmatpush.msra.mxu0 0.0
        %731 = vmatpush.msra.mxu0 %v708
        %732 = vmatpush.msra.mxu0 %v706
        %733 = vmatmul.f32.gmra.mxu0 %v712
        %v734 = vpop.f32.mrf.mxu0
        %v735 = vadd.f32 0.0, %v734
        %736 = vmatmul.f32.gmra.mxu0 %v715
        %v737 = vpop.f32.mrf.mxu0
        %v738 = vadd.f32 0.0, %v737
        %739 = vdwg.mxu0
        %742 = vrot.lane.b32.xlu0 %v735, 32
        %v743 = vpop.permute.xlu0 %742
        %744 = vrot.lane.b32.xlu0 %v738, 32
        %v745 = vpop.permute.xlu0 %744
        %vm748 = vcmask 392448
        %749 = vst.msk [vmem:[#allocation2] sm:$0xff] %vm748, %v743
        %750 = vst.msk [vmem:[#allocation2 + $0x8] sm:$0xff] %vm748, %v745
        %751 = vrot.lane.b32.xlu0 %v391, 80
        %v752 = vpop.permute.xlu0 %751
        %753 = vrot.lane.b32.xlu0 %v394, 80
        %v754 = vpop.permute.xlu0 %753
        %755 = vrot.lane.b32.xlu0 %v414, 80
        %v756 = vpop.permute.xlu0 %755
        %757 = vrot.lane.b32.xlu0 %v417, 80
        %v758 = vpop.permute.xlu0 %757
        %v759 = vsel %vm446, %v752, 0
        %v761 = vsel %vm446, %v754, 0
        %v763 = vsel %vm446, %v756, 0
        %v765 = vsel %vm446, %v758, 0
        %767 = vmatpush.xpose.msra.mxu0 0.0
        %768 = vmatpush.xpose.msra.mxu0 0.0
        %769 = vmatpush.xpose.msra.mxu0 0.0
        %770 = vmatpush.xpose.msra.mxu0 0.0
        %771 = vmatpush.xpose.msra.mxu0 0.0
        %772 = vmatpush.xpose.msra.mxu0 0.0
        %773 = vmatpush.xpose.msra.mxu0 0.0
        %774 = vmatpush.xpose.msra.mxu0 0.0
        %775 = vmatpush.xpose.msra.mxu0 0.0
        %776 = vmatpush.xpose.msra.mxu0 0.0
        %777 = vmatpush.xpose.msra.mxu0 0.0
        %778 = vmatpush.xpose.msra.mxu0 0.0
        %779 = vmatpush.xpose.msra.mxu0 0.0
        %780 = vmatpush.xpose.msra.mxu0 0.0
        %781 = vmatpush.xpose.msra.mxu0 %v765
        %782 = vmatpush.xpose.msra.mxu0 %v763
        %783 = vmatmul.f32.gmra.mxu0 %v759
        %v784 = vpop.f32.mrf.mxu0
        %v785 = vadd.f32 0.0, %v784
        %786 = vmatmul.f32.gmra.mxu0 %v761
        %v787 = vpop.f32.mrf.mxu0
        %v788 = vadd.f32 0.0, %v787
        %789 = vdwg.mxu0
        %v790 = vsel %vm446, %v785, -inf
        %791 = vmax.xlane.f32.xlu0 %v790
        %v792 = vpop.xlane.xlu0 %791
        %v793 = vsel %vm446, %v788, -inf
        %794 = vmax.xlane.f32.xlu0 %v793
        %v795 = vpop.xlane.xlu0 %794
        %v796 = vsub.f32 %v785, %v792
        %v797 = vsub.f32 %v788, %v795
        %v798 = vmul.f32 %v796, 1.442695
        %v799 = vpow.pop %v798
        %v800 = vmul.f32 %v797, 1.442695
        %v801 = vpow.pop %v800
        %v802 = vsel %vm446, %v799, 0.0
        %803 = vadd.xlane.f32.xlu0 %v802
        %v804 = vpop.xlane.xlu0 %803
        %v805 = vsel %vm446, %v801, 0.0
        %806 = vadd.xlane.f32.xlu0 %v805
        %v807 = vpop.xlane.xlu0 %806
        %v808 = vrcp.pop %v804
        %v809 = vrcp.pop %v807
        %v810 = vmul.f32 %v799, %v808
        %v811 = vmul.f32 %v801, %v809
        %812 = vrot.lane.b32.xlu0 %v437, 80
        %v813 = vpop.permute.xlu0 %812
        %814 = vrot.lane.b32.xlu0 %v440, 80
        %v815 = vpop.permute.xlu0 %814
        %v819 = vsel %vm446, %v810, 0
        %v822 = vsel %vm446, %v811, 0
        %824 = vmatpush.msra.mxu0 0.0
        %825 = vmatpush.msra.mxu0 0.0
        %826 = vmatpush.msra.mxu0 0.0
        %827 = vmatpush.msra.mxu0 0.0
        %828 = vmatpush.msra.mxu0 0.0
        %829 = vmatpush.msra.mxu0 0.0
        %830 = vmatpush.msra.mxu0 0.0
        %831 = vmatpush.msra.mxu0 0.0
        %832 = vmatpush.msra.mxu0 0.0
        %833 = vmatpush.msra.mxu0 0.0
        %834 = vmatpush.msra.mxu0 0.0
        %835 = vmatpush.msra.mxu0 0.0
        %836 = vmatpush.msra.mxu0 0.0
        %837 = vmatpush.msra.mxu0 0.0
        %838 = vmatpush.msra.mxu0 %v815
        %839 = vmatpush.msra.mxu0 %v813
        %840 = vmatmul.f32.gmra.mxu0 %v819
        %v841 = vpop.f32.mrf.mxu0
        %v842 = vadd.f32 0.0, %v841
        %843 = vmatmul.f32.gmra.mxu0 %v822
        %v844 = vpop.f32.mrf.mxu0
        %v845 = vadd.f32 0.0, %v844
        %846 = vdwg.mxu0
        %849 = vrot.lane.b32.xlu0 %v842, 48
        %v850 = vpop.permute.xlu0 %849
        %851 = vrot.lane.b32.xlu0 %v845, 48
        %v852 = vpop.permute.xlu0 %851
        %vm855 = vcmask 523648
        %856 = vst.msk [vmem:[#allocation2] sm:$0xff] %vm855, %v850
        %857 = vst.msk [vmem:[#allocation2 + $0x8] sm:$0xff] %vm855, %v852
        %858 = vrot.lane.b32.xlu0 %v391, 64
        %v859 = vpop.permute.xlu0 %858
        %860 = vrot.lane.b32.xlu0 %v394, 64
        %v861 = vpop.permute.xlu0 %860
        %862 = vrot.lane.b32.xlu0 %v414, 64
        %v863 = vpop.permute.xlu0 %862
        %864 = vrot.lane.b32.xlu0 %v417, 64
        %v865 = vpop.permute.xlu0 %864
        %v866 = vsel %vm446, %v859, 0
        %v868 = vsel %vm446, %v861, 0
        %v870 = vsel %vm446, %v863, 0
        %v872 = vsel %vm446, %v865, 0
        %874 = vmatpush.xpose.msra.mxu0 0.0
        %875 = vmatpush.xpose.msra.mxu0 0.0
        %876 = vmatpush.xpose.msra.mxu0 0.0
        %877 = vmatpush.xpose.msra.mxu0 0.0
        %878 = vmatpush.xpose.msra.mxu0 0.0
        %879 = vmatpush.xpose.msra.mxu0 0.0
        %880 = vmatpush.xpose.msra.mxu0 0.0
        %881 = vmatpush.xpose.msra.mxu0 0.0
        %882 = vmatpush.xpose.msra.mxu0 0.0
        %883 = vmatpush.xpose.msra.mxu0 0.0
        %884 = vmatpush.xpose.msra.mxu0 0.0
        %885 = vmatpush.xpose.msra.mxu0 0.0
        %886 = vmatpush.xpose.msra.mxu0 0.0
        %887 = vmatpush.xpose.msra.mxu0 0.0
        %888 = vmatpush.xpose.msra.mxu0 %v872
        %889 = vmatpush.xpose.msra.mxu0 %v870
        %890 = vmatmul.f32.gmra.mxu0 %v866
        %v891 = vpop.f32.mrf.mxu0
        %v892 = vadd.f32 0.0, %v891
        %893 = vmatmul.f32.gmra.mxu0 %v868
        %v894 = vpop.f32.mrf.mxu0
        %v895 = vadd.f32 0.0, %v894
        %896 = vdwg.mxu0
        %v897 = vsel %vm446, %v892, -inf
        %898 = vmax.xlane.f32.xlu0 %v897
        %v899 = vpop.xlane.xlu0 %898
        %v900 = vsel %vm446, %v895, -inf
        %901 = vmax.xlane.f32.xlu0 %v900
        %v902 = vpop.xlane.xlu0 %901
        %v903 = vsub.f32 %v892, %v899
        %v904 = vsub.f32 %v895, %v902
        %v905 = vmul.f32 %v903, 1.442695
        %v906 = vpow.pop %v905
        %v907 = vmul.f32 %v904, 1.442695
        %v908 = vpow.pop %v907
        %v909 = vsel %vm446, %v906, 0.0
        %910 = vadd.xlane.f32.xlu0 %v909
        %v911 = vpop.xlane.xlu0 %910
        %v912 = vsel %vm446, %v908, 0.0
        %913 = vadd.xlane.f32.xlu0 %v912
        %v914 = vpop.xlane.xlu0 %913
        %v915 = vrcp.pop %v911
        %v916 = vrcp.pop %v914
        %v917 = vmul.f32 %v906, %v915
        %v918 = vmul.f32 %v908, %v916
        %919 = vrot.lane.b32.xlu0 %v437, 64
        %v920 = vpop.permute.xlu0 %919
        %921 = vrot.lane.b32.xlu0 %v440, 64
        %v922 = vpop.permute.xlu0 %921
        %v926 = vsel %vm446, %v917, 0
        %v929 = vsel %vm446, %v918, 0
        %931 = vmatpush.msra.mxu0 0.0
        %932 = vmatpush.msra.mxu0 0.0
        %933 = vmatpush.msra.mxu0 0.0
        %934 = vmatpush.msra.mxu0 0.0
        %935 = vmatpush.msra.mxu0 0.0
        %936 = vmatpush.msra.mxu0 0.0
        %937 = vmatpush.msra.mxu0 0.0
        %938 = vmatpush.msra.mxu0 0.0
        %939 = vmatpush.msra.mxu0 0.0
        %940 = vmatpush.msra.mxu0 0.0
        %941 = vmatpush.msra.mxu0 0.0
        %942 = vmatpush.msra.mxu0 0.0
        %943 = vmatpush.msra.mxu0 0.0
        %944 = vmatpush.msra.mxu0 0.0
        %945 = vmatpush.msra.mxu0 %v922
        %946 = vmatpush.msra.mxu0 %v920
        %947 = vmatmul.f32.gmra.mxu0 %v926
        %v948 = vpop.f32.mrf.mxu0
        %v949 = vadd.f32 0.0, %v948
        %950 = vmatmul.f32.gmra.mxu0 %v929
        %v951 = vpop.f32.mrf.mxu0
        %v952 = vadd.f32 0.0, %v951
        %953 = vdwg.mxu0
        %956 = vrot.lane.b32.xlu0 %v949, 64
        %v957 = vpop.permute.xlu0 %956
        %958 = vrot.lane.b32.xlu0 %v952, 64
        %v959 = vpop.permute.xlu0 %958
        %vm962 = vcmask 654848
        %963 = vst.msk [vmem:[#allocation2] sm:$0xff] %vm962, %v957
        %964 = vst.msk [vmem:[#allocation2 + $0x8] sm:$0xff] %vm962, %v959
        %965 = vrot.lane.b32.xlu0 %v391, 48
        %v966 = vpop.permute.xlu0 %965
        %967 = vrot.lane.b32.xlu0 %v394, 48
        %v968 = vpop.permute.xlu0 %967
        %969 = vrot.lane.b32.xlu0 %v414, 48
        %v970 = vpop.permute.xlu0 %969
        %971 = vrot.lane.b32.xlu0 %v417, 48
        %v972 = vpop.permute.xlu0 %971
        %v973 = vsel %vm446, %v966, 0
        %v975 = vsel %vm446, %v968, 0
        %v977 = vsel %vm446, %v970, 0
        %v979 = vsel %vm446, %v972, 0
        %981 = vmatpush.xpose.msra.mxu0 0.0
        %982 = vmatpush.xpose.msra.mxu0 0.0
        %983 = vmatpush.xpose.msra.mxu0 0.0
        %984 = vmatpush.xpose.msra.mxu0 0.0
        %985 = vmatpush.xpose.msra.mxu0 0.0
        %986 = vmatpush.xpose.msra.mxu0 0.0
        %987 = vmatpush.xpose.msra.mxu0 0.0
        %988 = vmatpush.xpose.msra.mxu0 0.0
        %989 = vmatpush.xpose.msra.mxu0 0.0
        %990 = vmatpush.xpose.msra.mxu0 0.0
        %991 = vmatpush.xpose.msra.mxu0 0.0
        %992 = vmatpush.xpose.msra.mxu0 0.0
        %993 = vmatpush.xpose.msra.mxu0 0.0
        %994 = vmatpush.xpose.msra.mxu0 0.0
        %995 = vmatpush.xpose.msra.mxu0 %v979
        %996 = vmatpush.xpose.msra.mxu0 %v977
        %997 = vmatmul.f32.gmra.mxu0 %v973
        %v998 = vpop.f32.mrf.mxu0
        %v999 = vadd.f32 0.0, %v998
        %1000 = vmatmul.f32.gmra.mxu0 %v975
        %v1001 = vpop.f32.mrf.mxu0
        %v1002 = vadd.f32 0.0, %v1001
        %1003 = vdwg.mxu0
        %v1004 = vsel %vm446, %v999, -inf
        %1005 = vmax.xlane.f32.xlu0 %v1004
        %v1006 = vpop.xlane.xlu0 %1005
        %v1007 = vsel %vm446, %v1002, -inf
        %1008 = vmax.xlane.f32.xlu0 %v1007
        %v1009 = vpop.xlane.xlu0 %1008
        %v1010 = vsub.f32 %v999, %v1006
        %v1011 = vsub.f32 %v1002, %v1009
        %v1012 = vmul.f32 %v1010, 1.442695
        %v1013 = vpow.pop %v1012
        %v1014 = vmul.f32 %v1011, 1.442695
        %v1015 = vpow.pop %v1014
        %v1016 = vsel %vm446, %v1013, 0.0
        %1017 = vadd.xlane.f32.xlu0 %v1016
        %v1018 = vpop.xlane.xlu0 %1017
        %v1019 = vsel %vm446, %v1015, 0.0
        %1020 = vadd.xlane.f32.xlu0 %v1019
        %v1021 = vpop.xlane.xlu0 %1020
        %v1022 = vrcp.pop %v1018
        %v1023 = vrcp.pop %v1021
        %v1024 = vmul.f32 %v1013, %v1022
        %v1025 = vmul.f32 %v1015, %v1023
        %1026 = vrot.lane.b32.xlu0 %v437, 48
        %v1027 = vpop.permute.xlu0 %1026
        %1028 = vrot.lane.b32.xlu0 %v440, 48
        %v1029 = vpop.permute.xlu0 %1028
        %v1033 = vsel %vm446, %v1024, 0
        %v1036 = vsel %vm446, %v1025, 0
        %1038 = vmatpush.msra.mxu0 0.0
        %1039 = vmatpush.msra.mxu0 0.0
        %1040 = vmatpush.msra.mxu0 0.0
        %1041 = vmatpush.msra.mxu0 0.0
        %1042 = vmatpush.msra.mxu0 0.0
        %1043 = vmatpush.msra.mxu0 0.0
        %1044 = vmatpush.msra.mxu0 0.0
        %1045 = vmatpush.msra.mxu0 0.0
        %1046 = vmatpush.msra.mxu0 0.0
        %1047 = vmatpush.msra.mxu0 0.0
        %1048 = vmatpush.msra.mxu0 0.0
        %1049 = vmatpush.msra.mxu0 0.0
        %1050 = vmatpush.msra.mxu0 0.0
        %1051 = vmatpush.msra.mxu0 0.0
        %1052 = vmatpush.msra.mxu0 %v1029
        %1053 = vmatpush.msra.mxu0 %v1027
        %1054 = vmatmul.f32.gmra.mxu0 %v1033
        %v1055 = vpop.f32.mrf.mxu0
        %v1056 = vadd.f32 0.0, %v1055
        %1057 = vmatmul.f32.gmra.mxu0 %v1036
        %v1058 = vpop.f32.mrf.mxu0
        %v1059 = vadd.f32 0.0, %v1058
        %1060 = vdwg.mxu0
        %1063 = vrot.lane.b32.xlu0 %v1056, 80
        %v1064 = vpop.permute.xlu0 %1063
        %1065 = vrot.lane.b32.xlu0 %v1059, 80
        %v1066 = vpop.permute.xlu0 %1065
        %vm1069 = vcmask 786048
        %1070 = vst.msk [vmem:[#allocation2] sm:$0xff] %vm1069, %v1064
        %1071 = vst.msk [vmem:[#allocation2 + $0x8] sm:$0xff] %vm1069, %v1066
        %1072 = vrot.lane.b32.xlu0 %v391, 32
        %v1073 = vpop.permute.xlu0 %1072
        %1074 = vrot.lane.b32.xlu0 %v394, 32
        %v1075 = vpop.permute.xlu0 %1074
        %1076 = vrot.lane.b32.xlu0 %v414, 32
        %v1077 = vpop.permute.xlu0 %1076
        %1078 = vrot.lane.b32.xlu0 %v417, 32
        %v1079 = vpop.permute.xlu0 %1078
        %v1080 = vsel %vm446, %v1073, 0
        %v1082 = vsel %vm446, %v1075, 0
        %v1084 = vsel %vm446, %v1077, 0
        %v1086 = vsel %vm446, %v1079, 0
        %1088 = vmatpush.xpose.msra.mxu0 0.0
        %1089 = vmatpush.xpose.msra.mxu0 0.0
        %1090 = vmatpush.xpose.msra.mxu0 0.0
        %1091 = vmatpush.xpose.msra.mxu0 0.0
        %1092 = vmatpush.xpose.msra.mxu0 0.0
        %1093 = vmatpush.xpose.msra.mxu0 0.0
        %1094 = vmatpush.xpose.msra.mxu0 0.0
        %1095 = vmatpush.xpose.msra.mxu0 0.0
        %1096 = vmatpush.xpose.msra.mxu0 0.0
        %1097 = vmatpush.xpose.msra.mxu0 0.0
        %1098 = vmatpush.xpose.msra.mxu0 0.0
        %1099 = vmatpush.xpose.msra.mxu0 0.0
        %1100 = vmatpush.xpose.msra.mxu0 0.0
        %1101 = vmatpush.xpose.msra.mxu0 0.0
        %1102 = vmatpush.xpose.msra.mxu0 %v1086
        %1103 = vmatpush.xpose.msra.mxu0 %v1084
        %1104 = vmatmul.f32.gmra.mxu0 %v1080
        %v1105 = vpop.f32.mrf.mxu0
        %v1106 = vadd.f32 0.0, %v1105
        %1107 = vmatmul.f32.gmra.mxu0 %v1082
        %v1108 = vpop.f32.mrf.mxu0
        %v1109 = vadd.f32 0.0, %v1108
        %1110 = vdwg.mxu0
        %v1111 = vsel %vm446, %v1106, -inf
        %1112 = vmax.xlane.f32.xlu0 %v1111
        %v1113 = vpop.xlane.xlu0 %1112
        %v1114 = vsel %vm446, %v1109, -inf
        %1115 = vmax.xlane.f32.xlu0 %v1114
        %v1116 = vpop.xlane.xlu0 %1115
        %v1117 = vsub.f32 %v1106, %v1113
        %v1118 = vsub.f32 %v1109, %v1116
        %v1119 = vmul.f32 %v1117, 1.442695
        %v1120 = vpow.pop %v1119
        %v1121 = vmul.f32 %v1118, 1.442695
        %v1122 = vpow.pop %v1121
        %v1123 = vsel %vm446, %v1120, 0.0
        %1124 = vadd.xlane.f32.xlu0 %v1123
        %v1125 = vpop.xlane.xlu0 %1124
        %v1126 = vsel %vm446, %v1122, 0.0
        %1127 = vadd.xlane.f32.xlu0 %v1126
        %v1128 = vpop.xlane.xlu0 %1127
        %v1129 = vrcp.pop %v1125
        %v1130 = vrcp.pop %v1128
        %v1131 = vmul.f32 %v1120, %v1129
        %v1132 = vmul.f32 %v1122, %v1130
        %1133 = vrot.lane.b32.xlu0 %v437, 32
        %v1134 = vpop.permute.xlu0 %1133
        %1135 = vrot.lane.b32.xlu0 %v440, 32
        %v1136 = vpop.permute.xlu0 %1135
        %v1140 = vsel %vm446, %v1131, 0
        %v1143 = vsel %vm446, %v1132, 0
        %1145 = vmatpush.msra.mxu0 0.0
        %1146 = vmatpush.msra.mxu0 0.0
        %1147 = vmatpush.msra.mxu0 0.0
        %1148 = vmatpush.msra.mxu0 0.0
        %1149 = vmatpush.msra.mxu0 0.0
        %1150 = vmatpush.msra.mxu0 0.0
        %1151 = vmatpush.msra.mxu0 0.0
        %1152 = vmatpush.msra.mxu0 0.0
        %1153 = vmatpush.msra.mxu0 0.0
        %1154 = vmatpush.msra.mxu0 0.0
        %1155 = vmatpush.msra.mxu0 0.0
        %1156 = vmatpush.msra.mxu0 0.0
        %1157 = vmatpush.msra.mxu0 0.0
        %1158 = vmatpush.msra.mxu0 0.0
        %1159 = vmatpush.msra.mxu0 %v1136
        %1160 = vmatpush.msra.mxu0 %v1134
        %1161 = vmatmul.f32.gmra.mxu0 %v1140
        %v1162 = vpop.f32.mrf.mxu0
        %v1163 = vadd.f32 0.0, %v1162
        %1164 = vmatmul.f32.gmra.mxu0 %v1143
        %v1165 = vpop.f32.mrf.mxu0
        %v1166 = vadd.f32 0.0, %v1165
        %1167 = vdwg.mxu0
        %1170 = vrot.lane.b32.xlu0 %v1163, 96
        %v1171 = vpop.permute.xlu0 %1170
        %1172 = vrot.lane.b32.xlu0 %v1166, 96
        %v1173 = vpop.permute.xlu0 %1172
        %vm1176 = vcmask 917248
        %1177 = vst.msk [vmem:[#allocation2] sm:$0xff] %vm1176, %v1171
        %1178 = vst.msk [vmem:[#allocation2 + $0x8] sm:$0xff] %vm1176, %v1173
        %1179 = vrot.lane.b32.xlu0 %v391, 16
        %v1180 = vpop.permute.xlu0 %1179
        %1181 = vrot.lane.b32.xlu0 %v394, 16
        %v1182 = vpop.permute.xlu0 %1181
        %1183 = vrot.lane.b32.xlu0 %v414, 16
        %v1184 = vpop.permute.xlu0 %1183
        %1185 = vrot.lane.b32.xlu0 %v417, 16
        %v1186 = vpop.permute.xlu0 %1185
        %v1187 = vsel %vm446, %v1180, 0
        %v1189 = vsel %vm446, %v1182, 0
        %v1191 = vsel %vm446, %v1184, 0
        %v1193 = vsel %vm446, %v1186, 0
        %1195 = vmatpush.xpose.msra.mxu0 0.0
        %1196 = vmatpush.xpose.msra.mxu0 0.0
        %1197 = vmatpush.xpose.msra.mxu0 0.0
        %1198 = vmatpush.xpose.msra.mxu0 0.0
        %1199 = vmatpush.xpose.msra.mxu0 0.0
        %1200 = vmatpush.xpose.msra.mxu0 0.0
        %1201 = vmatpush.xpose.msra.mxu0 0.0
        %1202 = vmatpush.xpose.msra.mxu0 0.0
        %1203 = vmatpush.xpose.msra.mxu0 0.0
        %1204 = vmatpush.xpose.msra.mxu0 0.0
        %1205 = vmatpush.xpose.msra.mxu0 0.0
        %1206 = vmatpush.xpose.msra.mxu0 0.0
        %1207 = vmatpush.xpose.msra.mxu0 0.0
        %1208 = vmatpush.xpose.msra.mxu0 0.0
        %1209 = vmatpush.xpose.msra.mxu0 %v1193
        %1210 = vmatpush.xpose.msra.mxu0 %v1191
        %1211 = vmatmul.f32.gmra.mxu0 %v1187
        %v1212 = vpop.f32.mrf.mxu0
        %v1213 = vadd.f32 0.0, %v1212
        %1214 = vmatmul.f32.gmra.mxu0 %v1189
        %v1215 = vpop.f32.mrf.mxu0
        %v1216 = vadd.f32 0.0, %v1215
        %1217 = vdwg.mxu0
        %v1218 = vsel %vm446, %v1213, -inf
        %1219 = vmax.xlane.f32.xlu0 %v1218
        %v1220 = vpop.xlane.xlu0 %1219
        %v1221 = vsel %vm446, %v1216, -inf
        %1222 = vmax.xlane.f32.xlu0 %v1221
        %v1223 = vpop.xlane.xlu0 %1222
        %v1224 = vsub.f32 %v1213, %v1220
        %v1225 = vsub.f32 %v1216, %v1223
        %v1226 = vmul.f32 %v1224, 1.442695
        %v1227 = vpow.pop %v1226
        %v1228 = vmul.f32 %v1225, 1.442695
        %v1229 = vpow.pop %v1228
        %v1230 = vsel %vm446, %v1227, 0.0
        %1231 = vadd.xlane.f32.xlu0 %v1230
        %v1232 = vpop.xlane.xlu0 %1231
        %v1233 = vsel %vm446, %v1229, 0.0
        %1234 = vadd.xlane.f32.xlu0 %v1233
        %v1235 = vpop.xlane.xlu0 %1234
        %v1236 = vrcp.pop %v1232
        %v1237 = vrcp.pop %v1235
        %v1238 = vmul.f32 %v1227, %v1236
        %v1239 = vmul.f32 %v1229, %v1237
        %1240 = vrot.lane.b32.xlu0 %v437, 16
        %v1241 = vpop.permute.xlu0 %1240
        %1242 = vrot.lane.b32.xlu0 %v440, 16
        %v1243 = vpop.permute.xlu0 %1242
        %v1247 = vsel %vm446, %v1238, 0
        %v1250 = vsel %vm446, %v1239, 0
        %1252 = vmatpush.msra.mxu0 0.0
        %1253 = vmatpush.msra.mxu0 0.0
        %1254 = vmatpush.msra.mxu0 0.0
        %1255 = vmatpush.msra.mxu0 0.0
        %1256 = vmatpush.msra.mxu0 0.0
        %1257 = vmatpush.msra.mxu0 0.0
        %1258 = vmatpush.msra.mxu0 0.0
        %1259 = vmatpush.msra.mxu0 0.0
        %1260 = vmatpush.msra.mxu0 0.0
        %1261 = vmatpush.msra.mxu0 0.0
        %1262 = vmatpush.msra.mxu0 0.0
        %1263 = vmatpush.msra.mxu0 0.0
        %1264 = vmatpush.msra.mxu0 0.0
        %1265 = vmatpush.msra.mxu0 0.0
        %1266 = vmatpush.msra.mxu0 %v1243
        %1267 = vmatpush.msra.mxu0 %v1241
        %1268 = vmatmul.f32.gmra.mxu0 %v1247
        %v1269 = vpop.f32.mrf.mxu0
        %v1270 = vadd.f32 0.0, %v1269
        %1271 = vmatmul.f32.gmra.mxu0 %v1250
        %v1272 = vpop.f32.mrf.mxu0
        %v1273 = vadd.f32 0.0, %v1272
        %1274 = vdwg.mxu0
        %1277 = vrot.lane.b32.xlu0 %v1270, 112
        %v1278 = vpop.permute.xlu0 %1277
        %1279 = vrot.lane.b32.xlu0 %v1273, 112
        %v1280 = vpop.permute.xlu0 %1279
        %vm1283 = vcmask 1048448
        %1284 = vst.msk [vmem:[#allocation2] sm:$0xff] %vm1283, %v1278
        %1285 = vst.msk [vmem:[#allocation2 + $0x8] sm:$0xff] %vm1283, %v1280
        %v1286 = vld [vmem:[#allocation2] sm:$0xff]
        %v1287 = vld [vmem:[#allocation2 + $0x8] sm:$0xff]
        %v1288 = vld [vmem:[#allocation8] sm:$0xff]
        %v1289 = vld [vmem:[#allocation8 + $0x8] sm:$0xff]
        %v1290 = vld [vmem:[#allocation8 + $0x10] sm:$0xff]
        %v1291 = vld [vmem:[#allocation8 + $0x18] sm:$0xff]
        %v1292 = vld [vmem:[#allocation8 + $0x20] sm:$0xff]
        %v1293 = vld [vmem:[#allocation8 + $0x28] sm:$0xff]
        %v1294 = vld [vmem:[#allocation8 + $0x30] sm:$0xff]
        %v1295 = vld [vmem:[#allocation8 + $0x38] sm:$0xff]
        %v1296 = vld [vmem:[#allocation8 + $0x40] sm:$0xff]
        %v1297 = vld [vmem:[#allocation8 + $0x48] sm:$0xff]
        %v1298 = vld [vmem:[#allocation8 + $0x50] sm:$0xff]
        %v1299 = vld [vmem:[#allocation8 + $0x58] sm:$0xff]
        %v1300 = vld [vmem:[#allocation8 + $0x60] sm:$0xff]
        %v1301 = vld [vmem:[#allocation8 + $0x68] sm:$0xff]
        %v1302 = vld [vmem:[#allocation8 + $0x70] sm:$0xff]
        %v1303 = vld [vmem:[#allocation8 + $0x78] sm:$0xff]
        %v1304 = vld [vmem:[%s3] sm:$0x1]
        %v1306 = vperm.slane %v1304, 0
        %1308 = vmatpush.msra.mxu0 %v1303
        %1309 = vmatpush.msra.mxu0 %v1302
        %1310 = vmatpush.msra.mxu0 %v1301
        %1311 = vmatpush.msra.mxu0 %v1300
        %1312 = vmatpush.msra.mxu0 %v1299
        %1313 = vmatpush.msra.mxu0 %v1298
        %1314 = vmatpush.msra.mxu0 %v1297
        %1315 = vmatpush.msra.mxu0 %v1296
        %1316 = vmatpush.msra.mxu0 %v1295
        %1317 = vmatpush.msra.mxu0 %v1294
        %1318 = vmatpush.msra.mxu0 %v1293
        %1319 = vmatpush.msra.mxu0 %v1292
        %1320 = vmatpush.msra.mxu0 %v1291
        %1321 = vmatpush.msra.mxu0 %v1290
        %1322 = vmatpush.msra.mxu0 %v1289
        %1323 = vmatpush.msra.mxu0 %v1288
        %1324 = vmatmul.f32.gmra.mxu0 %v1286
        %v1325 = vpop.f32.mrf.mxu0
        %v1326 = vadd.f32 %v1306, %v1325
        %1327 = vmatmul.f32.gmra.mxu0 %v1287
        %v1328 = vpop.f32.mrf.mxu0
        %v1329 = vadd.f32 %v1306, %v1328
        %1330 = vdwg.mxu0
        %1331 = vst [vmem:[%s308] sm:$0xff] %v1326
        %1332 = vst [vmem:[%s308 + $0x8] sm:$0xff] %v1329
        %s1333 = sand.u32 %s125, 1
        %s1334 = scalar_lea.sflag [#allocation5], %s1333
        %s1335 = sand.u32 %s125, 1
        %s1336 = smul.addr %s1335, 16
        %s1337 = scalar_lea.vmem [#allocation9], %s1336
        %s1338 = sand.u32 %s28, 1
        %s1339 = scalar_lea.sflag [#allocation11], %s1338
        %s1340 = sand.u32 %s151, 1
        %s1341 = smul.addr %s1340, 16
        %s1342 = scalar_lea.vmem [#allocation10], %s1341
        %s1343 = sand.u32 %s28, 1
        %s1344 = scalar_lea.sflag [#allocation11], %s1343
        %s1345 = sand.u32 %s177, 1
        %s1346 = smul.addr %s1345, 16
        %s1347 = scalar_lea.vmem [#allocation12], %s1346
        // Predicated region
        $region49: #{tpu_custom_call.1} parent=35 // pred_check
          %p1348 = pneg %p135
        $region50: #{tpu_custom_call.1} parent=35 // pred_check_branch
          %1350 = sbr.rel (%p1348) target = $region52
        $region51: #{tpu_custom_call.1} parent=35 // pred_region
          %1352 = vsyncadd %s1334, 0
          %s1353 = smul.addr %s28, 2
          %s1354 = smul.addr %s1353, 8
          %s1355 = scalar_lea.hbm %s4, %s1354
          %s1356 = sshll.u32 %s1337, 4
          %s1357 = int_to_ptr.vmem [resolvable:$true] %s1356
          %s1358 = sshll.u32 %s1355, 4
          %s1359 = int_to_ptr.hbm [resolvable:$true] %s1358
          %1364 = dma.vmem_to_hbm [thread:$0]  %s1357, 256, %s1359, %s1334, 128, 128, 8
        $region52: #{tpu_custom_call.1} parent=35 // pred_fallthru
          _
        // Predicated region
        $region53: #{tpu_custom_call.1} parent=35 // pred_check
          %p1365 = pneg %p161
        $region54: #{tpu_custom_call.1} parent=35 // pred_check_branch
          %1367 = sbr.rel (%p1365) target = $region56
        $region55: #{tpu_custom_call.1} parent=35 // pred_region
          %1369 = vsyncadd %s1339, 0
          %s1370 = smul.addr %s28, 2
          %s1371 = smul.addr %s1370, 8
          %s1372 = scalar_lea.hbm %s5, %s1371
          %s1373 = sshll.u32 %s1342, 4
          %s1374 = int_to_ptr.vmem [resolvable:$true] %s1373
          %s1375 = sshll.u32 %s1372, 4
          %s1376 = int_to_ptr.hbm [resolvable:$true] %s1375
          %1381 = dma.vmem_to_hbm [thread:$0]  %s1374, 256, %s1376, %s1339, 128, 128, 8
        $region56: #{tpu_custom_call.1} parent=35 // pred_fallthru
          _
        // Predicated region
        $region57: #{tpu_custom_call.1} parent=35 // pred_check
          %p1382 = pneg %p187
        $region58: #{tpu_custom_call.1} parent=35 // pred_check_branch
          %1384 = sbr.rel (%p1382) target = $region60
        $region59: #{tpu_custom_call.1} parent=35 // pred_region
          %1386 = vsyncadd %s1344, 0
          %s1387 = smul.addr %s28, 2
          %s1388 = smul.addr %s1387, 8
          %s1389 = scalar_lea.hbm %s6, %s1388
          %s1390 = sshll.u32 %s1347, 4
          %s1391 = int_to_ptr.vmem [resolvable:$true] %s1390
          %s1392 = sshll.u32 %s1389, 4
          %s1393 = int_to_ptr.hbm [resolvable:$true] %s1392
          %1398 = dma.vmem_to_hbm [thread:$0]  %s1391, 256, %s1393, %s1344, 128, 128, 8
        $region60: #{tpu_custom_call.1} parent=35 // pred_fallthru
          _
      $region36: #{tpu_custom_call.1} parent=5 // pred_fallthru
        _
      %p1399 = scmp.le.s32.totalorder 2, %s23
      // Predicated region
      $region61: #{tpu_custom_call.1} parent=5 // pred_check
        %p1400 = pneg %p1399
      $region62: #{tpu_custom_call.1} parent=5 // pred_check_branch
        %1402 = sbr.rel (%p1400) target = $region64
      $region63: #{tpu_custom_call.1} parent=5 // pred_region
        %s1403 = ssub.s32 %s23, 2
        // Predicated region
        $region65: #{tpu_custom_call.1} parent=63 // pred_check
          %p1404 = pneg %p141
        $region66: #{tpu_custom_call.1} parent=63 // pred_check_branch
          %1406 = sbr.rel (%p1404) target = $region68
        $region67: #{tpu_custom_call.1} parent=63 // pred_region
          %s1407 = sand.u32 %s126, 1
          %s1408 = scalar_lea.sflag [#allocation5], %s1407
          %s1409 = sand.u32 %s126, 1
          %s1410 = smul.addr %s1409, 16
          %s1411 = scalar_lea.vmem [#allocation9], %s1410
          %1413 = dma.done %s1408, 256
        $region68: #{tpu_custom_call.1} parent=63 // pred_fallthru
          _
        // Predicated region
        $region69: #{tpu_custom_call.1} parent=63 // pred_check
          %p1414 = pneg %p167
        $region70: #{tpu_custom_call.1} parent=63 // pred_check_branch
          %1416 = sbr.rel (%p1414) target = $region72
        $region71: #{tpu_custom_call.1} parent=63 // pred_region
          %s1417 = sand.u32 %s29, 1
          %s1418 = scalar_lea.sflag [#allocation11], %s1417
          %s1419 = sand.u32 %s152, 1
          %s1420 = smul.addr %s1419, 16
          %s1421 = scalar_lea.vmem [#allocation10], %s1420
          %1423 = dma.done %s1418, 256
        $region72: #{tpu_custom_call.1} parent=63 // pred_fallthru
          _
        // Predicated region
        $region73: #{tpu_custom_call.1} parent=63 // pred_check
          %p1424 = pneg %p193
        $region74: #{tpu_custom_call.1} parent=63 // pred_check_branch
          %1426 = sbr.rel (%p1424) target = $region76
        $region75: #{tpu_custom_call.1} parent=63 // pred_region
          %s1427 = sand.u32 %s29, 1
          %s1428 = scalar_lea.sflag [#allocation11], %s1427
          %s1429 = sand.u32 %s178, 1
          %s1430 = smul.addr %s1429, 16
          %s1431 = scalar_lea.vmem [#allocation12], %s1430
          %1433 = dma.done %s1428, 256
        $region76: #{tpu_custom_call.1} parent=63 // pred_fallthru
          _
      $region64: #{tpu_custom_call.1} parent=5 // pred_fallthru
        _
    $region6: #{tpu_custom_call.1} parent=1 // loop_footer
      %s27 = sadd.s32 1, %s23
    $region7: #{tpu_custom_call.1} parent=1 // loop_footer_branch
      %22 = sbr.rel target = $region3
    $region8: #{tpu_custom_call.1} parent=1 // loop_exit
      _
    %1434 = vsyncpa [#allocation4], 1
    %s1435 = scalar_lea.sflag [#allocation4], 1
    %1436 = vsyncpa %s1435, 1
    %1437 = vsyncpa [#allocation7], 1
    %1438 = vsyncpa [#allocation5], 1
    %s1439 = scalar_lea.sflag [#allocation5], 1
    %1440 = vsyncpa %s1439, 1
    %1441 = vsyncpa [#allocation11], 1
    %s1442 = scalar_lea.sflag [#allocation11], 1
    %1443 = vsyncpa %s1442, 1

</llo_original>
